<compile_context>
chip_gen: v7x
topology: tpu7x:2x2x1
jax: 0.10.0
libtpu: 0.0.40
codegen_flags: <defaults>
</compile_context>

<pallas_src>
import functools

import numpy as np
import jax
import jax.numpy as jnp
from jax.experimental import pallas as pl
from jax.experimental.pallas import tpu as pltpu


# ----------------------------- Pallas kernel -------------------------------
def cot_kernel(x_ref, mask_ref, wk_ref, kb_ref, wv_ref, vb_ref,
               wa1k_ref, wa1x_ref, a1b_ref, wa2e_ref, ba2e_ref,
               out_ref, *, ksize, width, hw, margin):
    c = out_ref.shape[1]
    pad = ksize // 2
    kk = ksize * ksize

    xp = x_ref[0]                         # (C, HWp) bf16, zero-padded flat spatial axis

    # key_embed: grouped kxk conv as kk per-tap matmuls (BN scale folded into weights).
    # Each tap: bf16 matmul on the whole (aligned) padded slab, then a static f32
    # slice picks the shifted window; the constant mask zeroes row-wrap /
    # out-of-image neighbours.
    acc = jnp.zeros((c, hw), jnp.float32)
    for t in range(kk):
        dy = t // ksize - pad
        dx = t % ksize - pad
        start = margin + dy * width + dx
        y = jnp.dot(wk_ref[t], xp, preferred_element_type=jnp.float32)   # (C, HWp) f32
        acc = acc + y[:, start:start + hw] * mask_ref[t]
    k1 = jnp.maximum(acc + kb_ref[...], 0.0)                             # (C, HW) f32

    # value_embed: 1x1 conv + BN (scale folded into wv)
    v = jnp.dot(wv_ref[...], xp, preferred_element_type=jnp.float32)[:, margin:margin + hw]
    v = v + vb_ref[...]

    # attention_embed stage 1: 1x1 conv over concat([k1, x]) == two matmuls (BN folded)
    a1 = (jnp.dot(wa1k_ref[...], k1.astype(jnp.bfloat16),
                  preferred_element_type=jnp.float32)
          + jnp.dot(wa1x_ref[...], xp,
                    preferred_element_type=jnp.float32)[:, margin:margin + hw])
    a1 = jnp.maximum(a1 + a1b_ref[...], 0.0)                             # (Cmid, HW)

    # attention_embed stage 2 with the k*k-mean folded into the weights -> (C, HW)
    att = jnp.dot(wa2e_ref[...], a1.astype(jnp.bfloat16),
                  preferred_element_type=jnp.float32) + ba2e_ref[...]

    # softmax over spatial positions (lane axis), per channel
    m = jnp.max(att, axis=1, keepdims=True)
    e = jnp.exp(att - m)
    inv = pl.reciprocal(jnp.sum(e, axis=1, keepdims=True), approx=True)
    out_ref[0] = (k1 + (e * inv) * v).astype(out_ref.dtype)


# ------------------------------ wrapper -------------------------------------
def cot_attention_pallas(x_nchw, kernel_params, kernel_size=3):
    bs, c, h, w = x_nchw.shape
    hw = h * w
    kk = kernel_size * kernel_size
    pad = kernel_size // 2
    margin = pad * w + pad                 # max |flat shift| over the kxk taps
    hwp = hw + 2 * margin

    (wk, kb, wv, vb, wa1k, wa1x, a1b, wa2e, ba2e) = kernel_params
    cmid = wa1k.shape[0]

    # NCHW -> (bs, C, HW) (no transpose needed), zero-pad the flat spatial axis
    # so every conv tap is a static in-bounds slice; bf16 activations for the MXU.
    x_flat = x_nchw.reshape(bs, c, hw).astype(jnp.bfloat16)
    x_pad = jnp.pad(x_flat, ((0, 0), (0, 0), (margin, margin)))

    # per-tap validity masks (constant, built once on host, ~kk*HW floats)
    ys, xs = np.arange(h)[:, None], np.arange(w)[None, :]
    masks_np = np.zeros((kk, 1, hw), np.float32)
    for t in range(kk):
        dy, dx = t // kernel_size - pad, t % kernel_size - pad
        valid = (ys + dy >= 0) & (ys + dy < h) & (xs + dx >= 0) & (xs + dx < w)
        masks_np[t, 0] = valid.reshape(-1).astype(np.float32)
    masks = jnp.asarray(masks_np)

    flops = 2 * bs * hw * (kk * c * c + c * c + 2 * cmid * c + c * cmid)
    bytes_accessed = (int(x_pad.size) * 2 + bs * c * hw * 4 + int(masks.size) * 4
                      + (int(wk.size) + int(wv.size) + int(wa1k.size)
                         + int(wa1x.size) + int(wa2e.size)) * 2
                      + (int(kb.size) + int(vb.size) + int(a1b.size) + int(ba2e.size)) * 4)

    kernel = functools.partial(cot_kernel, ksize=kernel_size, width=w,
                               hw=hw, margin=margin)

    out = pl.pallas_call(
        kernel,
        out_shape=jax.ShapeDtypeStruct((bs, c, hw), jnp.float32),
        grid_spec=pltpu.PrefetchScalarGridSpec(
            num_scalar_prefetch=0,
            grid=(bs,),
            in_specs=[
                pl.BlockSpec((1, c, hwp), lambda b: (b, 0, 0)),   # padded x
                pl.BlockSpec((kk, 1, hw), lambda b: (0, 0, 0)),   # tap boundary masks
                pl.BlockSpec((kk, c, c), lambda b: (0, 0, 0)),    # key conv taps (BN folded)
                pl.BlockSpec((c, 1), lambda b: (0, 0)),           # key bias
                pl.BlockSpec((c, c), lambda b: (0, 0)),           # value 1x1 (BN folded)
                pl.BlockSpec((c, 1), lambda b: (0, 0)),           # value bias
                pl.BlockSpec((cmid, c), lambda b: (0, 0)),        # attn1 weight, k1 half
                pl.BlockSpec((cmid, c), lambda b: (0, 0)),        # attn1 weight, x half
                pl.BlockSpec((cmid, 1), lambda b: (0, 0)),        # attn1 bias
                pl.BlockSpec((c, cmid), lambda b: (0, 0)),        # attn2 weight (mean folded)
                pl.BlockSpec((c, 1), lambda b: (0, 0)),           # attn2 bias (mean folded)
            ],
            out_specs=pl.BlockSpec((1, c, hw), lambda b: (b, 0, 0)),
        ),
        compiler_params=pltpu.CompilerParams(dimension_semantics=("parallel",)),
        cost_estimate=pl.CostEstimate(flops=flops, transcendentals=bs * c * hw,
                                      bytes_accessed=bytes_accessed),
    )(x_pad, masks, wk, kb, wv, vb, wa1k, wa1x, a1b, wa2e, ba2e)

    # (bs, C, HW) -> NCHW (pure reshape, no transpose)
    return out.reshape(bs, c, h, w)


# ------------------------- parameter construction ---------------------------
def make_params(key, dim=16, kernel_size=3, factor=4, groups=4):
    eps = 1e-5
    cg = dim // groups
    cmid = 2 * dim // factor
    kk = kernel_size * kernel_size
    keys = jax.random.split(key, 8)

    def bn_params(k, n):
        k1_, k2_, k3_, k4_ = jax.random.split(k, 4)
        gamma = 1.0 + 0.1 * jax.random.normal(k1_, (n,), jnp.float32)
        beta = 0.1 * jax.random.normal(k2_, (n,), jnp.float32)
        mean = 0.1 * jax.random.normal(k3_, (n,), jnp.float32)
        var = 0.5 + jax.random.uniform(k4_, (n,), jnp.float32)
        return gamma, beta, mean, var

    # PyTorch-shaped parameters (deterministic, synthetic)
    w_key = 0.1 * jax.random.normal(keys[0], (dim, cg, kernel_size, kernel_size), jnp.float32)
    bn_key = bn_params(keys[1], dim)
    w_val = 0.1 * jax.random.normal(keys[2], (dim, dim, 1, 1), jnp.float32)
    bn_val = bn_params(keys[3], dim)
    w_a1 = 0.1 * jax.random.normal(keys[4], (cmid, 2 * dim, 1, 1), jnp.float32)
    bn_a1 = bn_params(keys[5], cmid)
    w_a2 = 0.1 * jax.random.normal(keys[6], (kk * dim, cmid, 1, 1), jnp.float32)
    b_a2 = 0.1 * jax.random.normal(keys[7], (kk * dim,), jnp.float32)

    torch_params = dict(w_key=w_key, bn_key=bn_key, w_val=w_val, bn_val=bn_val,
                        w_a1=w_a1, bn_a1=bn_a1, w_a2=w_a2, b_a2=b_a2)

    # ---- convert to the kernel layout: BN scales and k*k-mean folded in ----
    def bn_fold(bn):
        gamma, beta, mean, var = (np.asarray(t) for t in bn)
        s = gamma / np.sqrt(var + eps)
        return s, beta - mean * s

    ks_, kb_ = bn_fold(bn_key)
    vs_, vb_ = bn_fold(bn_val)
    a1s_, a1b_ = bn_fold(bn_a1)

    # grouped kxk conv -> per-tap dense (C_out, C_in) weights (block-diagonal), BN folded
    wk_np = np.asarray(w_key)
    wk_taps = np.zeros((kk, dim, dim), np.float32)        # (tap, cout, cin)
    for o in range(dim):
        g = o // cg
        for cl in range(cg):
            cin = g * cg + cl
            for ky in range(kernel_size):
                for kx in range(kernel_size):
                    wk_taps[ky * kernel_size + kx, o, cin] = wk_np[o, cl, ky, kx] * ks_[o]

    wv_t = np.asarray(w_val)[:, :, 0, 0] * vs_[:, None]   # (cout, cin), BN folded
    wa1 = np.asarray(w_a1)[:, :, 0, 0]                    # (cmid, 2*dim)
    wa1k = wa1[:, :dim] * a1s_[:, None]
    wa1x = wa1[:, dim:] * a1s_[:, None]
    # stage-2 1x1 conv with the k*k-mean folded in (exact): (C, cmid), (C,)
    wa2e = np.asarray(w_a2)[:, :, 0, 0].reshape(dim, kk, cmid).mean(axis=1)
    ba2e = np.asarray(b_a2).reshape(dim, kk).mean(axis=1)

    bf16 = jnp.bfloat16
    kernel_params = (jnp.asarray(wk_taps, bf16),
                     jnp.asarray(kb_[:, None], jnp.float32),
                     jnp.asarray(wv_t, bf16),
                     jnp.asarray(vb_[:, None], jnp.float32),
                     jnp.asarray(wa1k, bf16),
                     jnp.asarray(wa1x, bf16),
                     jnp.asarray(a1b_[:, None], jnp.float32),
                     jnp.asarray(wa2e, bf16),
                     jnp.asarray(ba2e[:, None], jnp.float32))
    return torch_params, kernel_params


# ----------------------- plain-JAX reference (for check) --------------------
def reference_forward(x, p, kernel_size=3, groups=4):
    eps = 1e-5
    bs, c, h, w = x.shape
    dn = ('NCHW', 'OIHW', 'NCHW')

    def bn(t, params):
        gamma, beta, mean, var = params
        s = gamma / jnp.sqrt(var + eps)
        return t * s[None, :, None, None] + (beta - mean * s)[None, :, None, None]

    pad = kernel_size // 2
    k1 = jax.lax.conv_general_dilated(x, p['w_key'], (1, 1), ((pad, pad), (pad, pad)),
                                      dimension_numbers=dn, feature_group_count=groups)
    k1 = jax.nn.relu(bn(k1, p['bn_key']))
    v = jax.lax.conv_general_dilated(x, p['w_val'], (1, 1), ((0, 0), (0, 0)),
                                     dimension_numbers=dn)
    v = bn(v, p['bn_val']).reshape(bs, c, -1)
    y = jnp.concatenate([k1, x], axis=1)
    a1 = jax.lax.conv_general_dilated(y, p['w_a1'], (1, 1), ((0, 0), (0, 0)),
                                      dimension_numbers=dn)
    a1 = jax.nn.relu(bn(a1, p['bn_a1']))
    a2 = jax.lax.conv_general_dilated(a1, p['w_a2'], (1, 1), ((0, 0), (0, 0)),
                                      dimension_numbers=dn)
    a2 = a2 + p['b_a2'][None, :, None, None]
    att = a2.reshape(bs, c, kernel_size * kernel_size, h, w).mean(2).reshape(bs, c, -1)
    k2 = jax.nn.softmax(att, axis=-1) * v
    return k1 + k2.reshape(bs, c, h, w)


if __name__ == "__main__":
    # dim divisible by groups=4 and factor=4; H*W = 256 so the lane dim is 128-aligned
    bs, dim, h, w, ksz = 2, 16, 16, 16, 3
    key = jax.random.PRNGKey(0)
    key_x, key_p = jax.random.split(key)
    x = jax.random.normal(key_x, (bs, dim, h, w), jnp.float32)   # NCHW like PyTorch

    torch_params, kernel_params = make_params(key_p, dim=dim, kernel_size=ksz)

    out = cot_attention_pallas(x, kernel_params, kernel_size=ksz)
    out = jax.block_until_ready(out)

    ref = reference_forward(x, torch_params, kernel_size=ksz)
    # tolerance covers bf16 MXU inputs + approx reciprocal vs. the f32 conv reference
    np.testing.assert_allclose(np.asarray(out), np.asarray(ref), rtol=2e-2, atol=2e-2)
    print("KERNEL_OK")
</pallas_src>

<mosaic_0001>
module attributes {stable_mosaic.version = 11 : i64} {
  func.func @cot_kernel(%arg0: i32, %arg1: memref<1x16x290xbf16, #tpu.memory_space<vmem>>, %arg2: memref<9x1x256xf32, #tpu.memory_space<vmem>>, %arg3: memref<9x16x16xbf16, #tpu.memory_space<vmem>>, %arg4: memref<16x1xf32, #tpu.memory_space<vmem>>, %arg5: memref<16x16xbf16, #tpu.memory_space<vmem>>, %arg6: memref<16x1xf32, #tpu.memory_space<vmem>>, %arg7: memref<8x16xbf16, #tpu.memory_space<vmem>>, %arg8: memref<8x16xbf16, #tpu.memory_space<vmem>>, %arg9: memref<8x1xf32, #tpu.memory_space<vmem>>, %arg10: memref<16x8xbf16, #tpu.memory_space<vmem>>, %arg11: memref<16x1xf32, #tpu.memory_space<vmem>>, %arg12: memref<1x16x256xf32, #tpu.memory_space<vmem>>) attributes {dimension_semantics = [#tpu.dimension_semantics<parallel>], iteration_bounds = array<i64: 2>, scalar_prefetch = 0 : i64, scratch_operands = 0 : i64, tpu.core_type = #tpu.core_type<tc>, window_params = [{transform_indices = @transform_0, window_bounds = array<i64: 1, 16, 290>}, {pipeline_mode = #tpu.pipeline_mode<synchronous>, transform_indices = @transform_1, window_bounds = array<i64: 9, 1, 256>}, {pipeline_mode = #tpu.pipeline_mode<synchronous>, transform_indices = @transform_2, window_bounds = array<i64: 9, 16, 16>}, {pipeline_mode = #tpu.pipeline_mode<synchronous>, transform_indices = @transform_3, window_bounds = array<i64: 16, 1>}, {pipeline_mode = #tpu.pipeline_mode<synchronous>, transform_indices = @transform_4, window_bounds = array<i64: 16, 16>}, {pipeline_mode = #tpu.pipeline_mode<synchronous>, transform_indices = @transform_5, window_bounds = array<i64: 16, 1>}, {pipeline_mode = #tpu.pipeline_mode<synchronous>, transform_indices = @transform_6, window_bounds = array<i64: 8, 16>}, {pipeline_mode = #tpu.pipeline_mode<synchronous>, transform_indices = @transform_7, window_bounds = array<i64: 8, 16>}, {pipeline_mode = #tpu.pipeline_mode<synchronous>, transform_indices = @transform_8, window_bounds = array<i64: 8, 1>}, {pipeline_mode = #tpu.pipeline_mode<synchronous>, transform_indices = @transform_9, window_bounds = array<i64: 16, 8>}, {pipeline_mode = #tpu.pipeline_mode<synchronous>, transform_indices = @transform_10, window_bounds = array<i64: 16, 1>}, {transform_indices = @transform_11, window_bounds = array<i64: 1, 16, 256>}]} {
    %c0 = arith.constant 0 : index
    %c0_0 = arith.constant 0 : index
    %c0_1 = arith.constant 0 : index
    %0 = vector.load %arg1[%c0, %c0_0, %c0_1] : memref<1x16x290xbf16, #tpu.memory_space<vmem>>, vector<1x16x290xbf16>
    %1 = vector.shape_cast %0 : vector<1x16x290xbf16> to vector<16x290xbf16>
    %cst = arith.constant 0.000000e+00 : f32
    %2 = vector.broadcast %cst : f32 to vector<16x256xf32>
    %c0_2 = arith.constant 0 : index
    %c0_3 = arith.constant 0 : index
    %c0_4 = arith.constant 0 : index
    %3 = vector.load %arg3[%c0_2, %c0_3, %c0_4] : memref<9x16x16xbf16, #tpu.memory_space<vmem>>, vector<1x16x16xbf16>
    %4 = vector.shape_cast %3 : vector<1x16x16xbf16> to vector<16x16xbf16>
    %cst_5 = arith.constant dense<0.000000e+00> : vector<16x290xf32>
    %5 = tpu.matmul %4, %1, %cst_5 {dimension_numbers = #tpu.dot_dimension_numbers<[1], [0], [0], [1], [0, 0, 1, 1], [], []>} : vector<16x16xbf16>, vector<16x290xbf16>, vector<16x290xf32> -> vector<16x290xf32>
    %6 = vector.extract_strided_slice %5 {offsets = [0, 0], sizes = [16, 256], strides = [1, 1]} : vector<16x290xf32> to vector<16x256xf32>
    %c0_6 = arith.constant 0 : index
    %c0_7 = arith.constant 0 : index
    %c0_8 = arith.constant 0 : index
    %7 = vector.load %arg2[%c0_6, %c0_7, %c0_8] : memref<9x1x256xf32, #tpu.memory_space<vmem>>, vector<1x1x256xf32>
    %8 = vector.shape_cast %7 : vector<1x1x256xf32> to vector<1x256xf32>
    %9 = vector.broadcast %8 : vector<1x256xf32> to vector<16x256xf32>
    %10 = arith.mulf %6, %9 : vector<16x256xf32>
    %11 = arith.addf %2, %10 : vector<16x256xf32>
    %c1 = arith.constant 1 : index
    %c0_9 = arith.constant 0 : index
    %c0_10 = arith.constant 0 : index
    %12 = vector.load %arg3[%c1, %c0_9, %c0_10] : memref<9x16x16xbf16, #tpu.memory_space<vmem>>, vector<1x16x16xbf16>
    %13 = vector.shape_cast %12 : vector<1x16x16xbf16> to vector<16x16xbf16>
    %cst_11 = arith.constant dense<0.000000e+00> : vector<16x290xf32>
    %14 = tpu.matmul %13, %1, %cst_11 {dimension_numbers = #tpu.dot_dimension_numbers<[1], [0], [0], [1], [0, 0, 1, 1], [], []>} : vector<16x16xbf16>, vector<16x290xbf16>, vector<16x290xf32> -> vector<16x290xf32>
    %15 = vector.extract_strided_slice %14 {offsets = [0, 1], sizes = [16, 256], strides = [1, 1]} : vector<16x290xf32> to vector<16x256xf32>
    %c1_12 = arith.constant 1 : index
    %c0_13 = arith.constant 0 : index
    %c0_14 = arith.constant 0 : index
    %16 = vector.load %arg2[%c1_12, %c0_13, %c0_14] : memref<9x1x256xf32, #tpu.memory_space<vmem>>, vector<1x1x256xf32>
    %17 = vector.shape_cast %16 : vector<1x1x256xf32> to vector<1x256xf32>
    %18 = vector.broadcast %17 : vector<1x256xf32> to vector<16x256xf32>
    %19 = arith.mulf %15, %18 : vector<16x256xf32>
    %20 = arith.addf %11, %19 : vector<16x256xf32>
    %c2 = arith.constant 2 : index
    %c0_15 = arith.constant 0 : index
    %c0_16 = arith.constant 0 : index
    %21 = vector.load %arg3[%c2, %c0_15, %c0_16] : memref<9x16x16xbf16, #tpu.memory_space<vmem>>, vector<1x16x16xbf16>
    %22 = vector.shape_cast %21 : vector<1x16x16xbf16> to vector<16x16xbf16>
    %cst_17 = arith.constant dense<0.000000e+00> : vector<16x290xf32>
    %23 = tpu.matmul %22, %1, %cst_17 {dimension_numbers = #tpu.dot_dimension_numbers<[1], [0], [0], [1], [0, 0, 1, 1], [], []>} : vector<16x16xbf16>, vector<16x290xbf16>, vector<16x290xf32> -> vector<16x290xf32>
    %24 = vector.extract_strided_slice %23 {offsets = [0, 2], sizes = [16, 256], strides = [1, 1]} : vector<16x290xf32> to vector<16x256xf32>
    %c2_18 = arith.constant 2 : index
    %c0_19 = arith.constant 0 : index
    %c0_20 = arith.constant 0 : index
    %25 = vector.load %arg2[%c2_18, %c0_19, %c0_20] : memref<9x1x256xf32, #tpu.memory_space<vmem>>, vector<1x1x256xf32>
    %26 = vector.shape_cast %25 : vector<1x1x256xf32> to vector<1x256xf32>
    %27 = vector.broadcast %26 : vector<1x256xf32> to vector<16x256xf32>
    %28 = arith.mulf %24, %27 : vector<16x256xf32>
    %29 = arith.addf %20, %28 : vector<16x256xf32>
    %c3 = arith.constant 3 : index
    %c0_21 = arith.constant 0 : index
    %c0_22 = arith.constant 0 : index
    %30 = vector.load %arg3[%c3, %c0_21, %c0_22] : memref<9x16x16xbf16, #tpu.memory_space<vmem>>, vector<1x16x16xbf16>
    %31 = vector.shape_cast %30 : vector<1x16x16xbf16> to vector<16x16xbf16>
    %cst_23 = arith.constant dense<0.000000e+00> : vector<16x290xf32>
    %32 = tpu.matmul %31, %1, %cst_23 {dimension_numbers = #tpu.dot_dimension_numbers<[1], [0], [0], [1], [0, 0, 1, 1], [], []>} : vector<16x16xbf16>, vector<16x290xbf16>, vector<16x290xf32> -> vector<16x290xf32>
    %33 = vector.extract_strided_slice %32 {offsets = [0, 16], sizes = [16, 256], strides = [1, 1]} : vector<16x290xf32> to vector<16x256xf32>
    %c3_24 = arith.constant 3 : index
    %c0_25 = arith.constant 0 : index
    %c0_26 = arith.constant 0 : index
    %34 = vector.load %arg2[%c3_24, %c0_25, %c0_26] : memref<9x1x256xf32, #tpu.memory_space<vmem>>, vector<1x1x256xf32>
    %35 = vector.shape_cast %34 : vector<1x1x256xf32> to vector<1x256xf32>
    %36 = vector.broadcast %35 : vector<1x256xf32> to vector<16x256xf32>
    %37 = arith.mulf %33, %36 : vector<16x256xf32>
    %38 = arith.addf %29, %37 : vector<16x256xf32>
    %c4 = arith.constant 4 : index
    %c0_27 = arith.constant 0 : index
    %c0_28 = arith.constant 0 : index
    %39 = vector.load %arg3[%c4, %c0_27, %c0_28] : memref<9x16x16xbf16, #tpu.memory_space<vmem>>, vector<1x16x16xbf16>
    %40 = vector.shape_cast %39 : vector<1x16x16xbf16> to vector<16x16xbf16>
    %cst_29 = arith.constant dense<0.000000e+00> : vector<16x290xf32>
    %41 = tpu.matmul %40, %1, %cst_29 {dimension_numbers = #tpu.dot_dimension_numbers<[1], [0], [0], [1], [0, 0, 1, 1], [], []>} : vector<16x16xbf16>, vector<16x290xbf16>, vector<16x290xf32> -> vector<16x290xf32>
    %42 = vector.extract_strided_slice %41 {offsets = [0, 17], sizes = [16, 256], strides = [1, 1]} : vector<16x290xf32> to vector<16x256xf32>
    %c4_30 = arith.constant 4 : index
    %c0_31 = arith.constant 0 : index
    %c0_32 = arith.constant 0 : index
    %43 = vector.load %arg2[%c4_30, %c0_31, %c0_32] : memref<9x1x256xf32, #tpu.memory_space<vmem>>, vector<1x1x256xf32>
    %44 = vector.shape_cast %43 : vector<1x1x256xf32> to vector<1x256xf32>
    %45 = vector.broadcast %44 : vector<1x256xf32> to vector<16x256xf32>
    %46 = arith.mulf %42, %45 : vector<16x256xf32>
    %47 = arith.addf %38, %46 : vector<16x256xf32>
    %c5 = arith.constant 5 : index
    %c0_33 = arith.constant 0 : index
    %c0_34 = arith.constant 0 : index
    %48 = vector.load %arg3[%c5, %c0_33, %c0_34] : memref<9x16x16xbf16, #tpu.memory_space<vmem>>, vector<1x16x16xbf16>
    %49 = vector.shape_cast %48 : vector<1x16x16xbf16> to vector<16x16xbf16>
    %cst_35 = arith.constant dense<0.000000e+00> : vector<16x290xf32>
    %50 = tpu.matmul %49, %1, %cst_35 {dimension_numbers = #tpu.dot_dimension_numbers<[1], [0], [0], [1], [0, 0, 1, 1], [], []>} : vector<16x16xbf16>, vector<16x290xbf16>, vector<16x290xf32> -> vector<16x290xf32>
    %51 = vector.extract_strided_slice %50 {offsets = [0, 18], sizes = [16, 256], strides = [1, 1]} : vector<16x290xf32> to vector<16x256xf32>
    %c5_36 = arith.constant 5 : index
    %c0_37 = arith.constant 0 : index
    %c0_38 = arith.constant 0 : index
    %52 = vector.load %arg2[%c5_36, %c0_37, %c0_38] : memref<9x1x256xf32, #tpu.memory_space<vmem>>, vector<1x1x256xf32>
    %53 = vector.shape_cast %52 : vector<1x1x256xf32> to vector<1x256xf32>
    %54 = vector.broadcast %53 : vector<1x256xf32> to vector<16x256xf32>
    %55 = arith.mulf %51, %54 : vector<16x256xf32>
    %56 = arith.addf %47, %55 : vector<16x256xf32>
    %c6 = arith.constant 6 : index
    %c0_39 = arith.constant 0 : index
    %c0_40 = arith.constant 0 : index
    %57 = vector.load %arg3[%c6, %c0_39, %c0_40] : memref<9x16x16xbf16, #tpu.memory_space<vmem>>, vector<1x16x16xbf16>
    %58 = vector.shape_cast %57 : vector<1x16x16xbf16> to vector<16x16xbf16>
    %cst_41 = arith.constant dense<0.000000e+00> : vector<16x290xf32>
    %59 = tpu.matmul %58, %1, %cst_41 {dimension_numbers = #tpu.dot_dimension_numbers<[1], [0], [0], [1], [0, 0, 1, 1], [], []>} : vector<16x16xbf16>, vector<16x290xbf16>, vector<16x290xf32> -> vector<16x290xf32>
    %60 = vector.extract_strided_slice %59 {offsets = [0, 32], sizes = [16, 256], strides = [1, 1]} : vector<16x290xf32> to vector<16x256xf32>
    %c6_42 = arith.constant 6 : index
    %c0_43 = arith.constant 0 : index
    %c0_44 = arith.constant 0 : index
    %61 = vector.load %arg2[%c6_42, %c0_43, %c0_44] : memref<9x1x256xf32, #tpu.memory_space<vmem>>, vector<1x1x256xf32>
    %62 = vector.shape_cast %61 : vector<1x1x256xf32> to vector<1x256xf32>
    %63 = vector.broadcast %62 : vector<1x256xf32> to vector<16x256xf32>
    %64 = arith.mulf %60, %63 : vector<16x256xf32>
    %65 = arith.addf %56, %64 : vector<16x256xf32>
    %c7 = arith.constant 7 : index
    %c0_45 = arith.constant 0 : index
    %c0_46 = arith.constant 0 : index
    %66 = vector.load %arg3[%c7, %c0_45, %c0_46] : memref<9x16x16xbf16, #tpu.memory_space<vmem>>, vector<1x16x16xbf16>
    %67 = vector.shape_cast %66 : vector<1x16x16xbf16> to vector<16x16xbf16>
    %cst_47 = arith.constant dense<0.000000e+00> : vector<16x290xf32>
    %68 = tpu.matmul %67, %1, %cst_47 {dimension_numbers = #tpu.dot_dimension_numbers<[1], [0], [0], [1], [0, 0, 1, 1], [], []>} : vector<16x16xbf16>, vector<16x290xbf16>, vector<16x290xf32> -> vector<16x290xf32>
    %69 = vector.extract_strided_slice %68 {offsets = [0, 33], sizes = [16, 256], strides = [1, 1]} : vector<16x290xf32> to vector<16x256xf32>
    %c7_48 = arith.constant 7 : index
    %c0_49 = arith.constant 0 : index
    %c0_50 = arith.constant 0 : index
    %70 = vector.load %arg2[%c7_48, %c0_49, %c0_50] : memref<9x1x256xf32, #tpu.memory_space<vmem>>, vector<1x1x256xf32>
    %71 = vector.shape_cast %70 : vector<1x1x256xf32> to vector<1x256xf32>
    %72 = vector.broadcast %71 : vector<1x256xf32> to vector<16x256xf32>
    %73 = arith.mulf %69, %72 : vector<16x256xf32>
    %74 = arith.addf %65, %73 : vector<16x256xf32>
    %c8 = arith.constant 8 : index
    %c0_51 = arith.constant 0 : index
    %c0_52 = arith.constant 0 : index
    %75 = vector.load %arg3[%c8, %c0_51, %c0_52] : memref<9x16x16xbf16, #tpu.memory_space<vmem>>, vector<1x16x16xbf16>
    %76 = vector.shape_cast %75 : vector<1x16x16xbf16> to vector<16x16xbf16>
    %cst_53 = arith.constant dense<0.000000e+00> : vector<16x290xf32>
    %77 = tpu.matmul %76, %1, %cst_53 {dimension_numbers = #tpu.dot_dimension_numbers<[1], [0], [0], [1], [0, 0, 1, 1], [], []>} : vector<16x16xbf16>, vector<16x290xbf16>, vector<16x290xf32> -> vector<16x290xf32>
    %78 = vector.extract_strided_slice %77 {offsets = [0, 34], sizes = [16, 256], strides = [1, 1]} : vector<16x290xf32> to vector<16x256xf32>
    %c8_54 = arith.constant 8 : index
    %c0_55 = arith.constant 0 : index
    %c0_56 = arith.constant 0 : index
    %79 = vector.load %arg2[%c8_54, %c0_55, %c0_56] : memref<9x1x256xf32, #tpu.memory_space<vmem>>, vector<1x1x256xf32>
    %80 = vector.shape_cast %79 : vector<1x1x256xf32> to vector<1x256xf32>
    %81 = vector.broadcast %80 : vector<1x256xf32> to vector<16x256xf32>
    %82 = arith.mulf %78, %81 : vector<16x256xf32>
    %83 = arith.addf %74, %82 : vector<16x256xf32>
    %c0_57 = arith.constant 0 : index
    %c0_58 = arith.constant 0 : index
    %84 = vector.load %arg4[%c0_57, %c0_58] : memref<16x1xf32, #tpu.memory_space<vmem>>, vector<16x1xf32>
    %85 = vector.broadcast %84 : vector<16x1xf32> to vector<16x256xf32>
    %86 = arith.addf %83, %85 : vector<16x256xf32>
    %cst_59 = arith.constant 0.000000e+00 : f32
    %87 = vector.broadcast %cst_59 : f32 to vector<16x256xf32>
    %88 = arith.maximumf %86, %87 : vector<16x256xf32>
    %c0_60 = arith.constant 0 : index
    %c0_61 = arith.constant 0 : index
    %89 = vector.load %arg5[%c0_60, %c0_61] : memref<16x16xbf16, #tpu.memory_space<vmem>>, vector<16x16xbf16>
    %cst_62 = arith.constant dense<0.000000e+00> : vector<16x290xf32>
    %90 = tpu.matmul %89, %1, %cst_62 {dimension_numbers = #tpu.dot_dimension_numbers<[1], [0], [0], [1], [0, 0, 1, 1], [], []>} : vector<16x16xbf16>, vector<16x290xbf16>, vector<16x290xf32> -> vector<16x290xf32>
    %91 = vector.extract_strided_slice %90 {offsets = [0, 17], sizes = [16, 256], strides = [1, 1]} : vector<16x290xf32> to vector<16x256xf32>
    %c0_63 = arith.constant 0 : index
    %c0_64 = arith.constant 0 : index
    %92 = vector.load %arg6[%c0_63, %c0_64] : memref<16x1xf32, #tpu.memory_space<vmem>>, vector<16x1xf32>
    %93 = vector.broadcast %92 : vector<16x1xf32> to vector<16x256xf32>
    %94 = arith.addf %91, %93 : vector<16x256xf32>
    %c0_65 = arith.constant 0 : index
    %c0_66 = arith.constant 0 : index
    %95 = vector.load %arg7[%c0_65, %c0_66] : memref<8x16xbf16, #tpu.memory_space<vmem>>, vector<8x16xbf16>
    %96 = arith.truncf %88 : vector<16x256xf32> to vector<16x256xbf16>
    %cst_67 = arith.constant dense<0.000000e+00> : vector<8x256xf32>
    %97 = tpu.matmul %95, %96, %cst_67 {dimension_numbers = #tpu.dot_dimension_numbers<[1], [0], [0], [1], [0, 0, 1, 1], [], []>} : vector<8x16xbf16>, vector<16x256xbf16>, vector<8x256xf32> -> vector<8x256xf32>
    %c0_68 = arith.constant 0 : index
    %c0_69 = arith.constant 0 : index
    %98 = vector.load %arg8[%c0_68, %c0_69] : memref<8x16xbf16, #tpu.memory_space<vmem>>, vector<8x16xbf16>
    %cst_70 = arith.constant dense<0.000000e+00> : vector<8x290xf32>
    %99 = tpu.matmul %98, %1, %cst_70 {dimension_numbers = #tpu.dot_dimension_numbers<[1], [0], [0], [1], [0, 0, 1, 1], [], []>} : vector<8x16xbf16>, vector<16x290xbf16>, vector<8x290xf32> -> vector<8x290xf32>
    %100 = vector.extract_strided_slice %99 {offsets = [0, 17], sizes = [8, 256], strides = [1, 1]} : vector<8x290xf32> to vector<8x256xf32>
    %101 = arith.addf %97, %100 : vector<8x256xf32>
    %c0_71 = arith.constant 0 : index
    %c0_72 = arith.constant 0 : index
    %102 = vector.load %arg9[%c0_71, %c0_72] : memref<8x1xf32, #tpu.memory_space<vmem>>, vector<8x1xf32>
    %103 = vector.broadcast %102 : vector<8x1xf32> to vector<8x256xf32>
    %104 = arith.addf %101, %103 : vector<8x256xf32>
    %cst_73 = arith.constant 0.000000e+00 : f32
    %105 = vector.broadcast %cst_73 : f32 to vector<8x256xf32>
    %106 = arith.maximumf %104, %105 : vector<8x256xf32>
    %c0_74 = arith.constant 0 : index
    %c0_75 = arith.constant 0 : index
    %107 = vector.load %arg10[%c0_74, %c0_75] : memref<16x8xbf16, #tpu.memory_space<vmem>>, vector<16x8xbf16>
    %108 = arith.truncf %106 : vector<8x256xf32> to vector<8x256xbf16>
    %cst_76 = arith.constant dense<0.000000e+00> : vector<16x256xf32>
    %109 = tpu.matmul %107, %108, %cst_76 {dimension_numbers = #tpu.dot_dimension_numbers<[1], [0], [0], [1], [0, 0, 1, 1], [], []>} : vector<16x8xbf16>, vector<8x256xbf16>, vector<16x256xf32> -> vector<16x256xf32>
    %c0_77 = arith.constant 0 : index
    %c0_78 = arith.constant 0 : index
    %110 = vector.load %arg11[%c0_77, %c0_78] : memref<16x1xf32, #tpu.memory_space<vmem>>, vector<16x1xf32>
    %111 = vector.broadcast %110 : vector<16x1xf32> to vector<16x256xf32>
    %112 = arith.addf %109, %111 : vector<16x256xf32>
    %cst_79 = arith.constant dense<0xFF800000> : vector<16xf32>
    %113 = vector.multi_reduction <maximumf>, %112, %cst_79 [1] : vector<16x256xf32> to vector<16xf32>
    %114 = vector.shape_cast %113 : vector<16xf32> to vector<16x1xf32>
    %115 = vector.broadcast %114 : vector<16x1xf32> to vector<16x256xf32>
    %116 = arith.subf %112, %115 : vector<16x256xf32>
    %117 = math.exp %116 : vector<16x256xf32>
    %cst_80 = arith.constant dense<0.000000e+00> : vector<16xf32>
    %118 = vector.multi_reduction <add>, %117, %cst_80 [1] : vector<16x256xf32> to vector<16xf32>
    %119 = vector.shape_cast %118 : vector<16xf32> to vector<16x1xf32>
    %120 = tpu.reciprocal %119 {approx = true} : vector<16x1xf32> -> vector<16x1xf32>
    %121 = vector.broadcast %120 : vector<16x1xf32> to vector<16x256xf32>
    %122 = arith.mulf %117, %121 : vector<16x256xf32>
    %123 = arith.mulf %122, %94 : vector<16x256xf32>
    %124 = arith.addf %88, %123 : vector<16x256xf32>
    %c0_81 = arith.constant 0 : index
    %c0_82 = arith.constant 0 : index
    %c0_83 = arith.constant 0 : index
    %125 = vector.load %arg12[%c0_81, %c0_82, %c0_83] : memref<1x16x256xf32, #tpu.memory_space<vmem>>, vector<1x16x256xf32>
    %126 = vector.shape_cast %125 : vector<1x16x256xf32> to vector<16x256xf32>
    %127 = vector.shape_cast %124 : vector<16x256xf32> to vector<1x16x256xf32>
    tpu.vector_store %arg12[%c0_81, %c0_82, %c0_83], %127 {strides = array<i32>} : memref<1x16x256xf32, #tpu.memory_space<vmem>>, vector<1x16x256xf32>,
    return
  }
  func.func @transform_0(%arg0: i32) -> (i32, i32, i32) {
    %c0_i32 = arith.constant 0 : i32
    %c0_i32_0 = arith.constant 0 : i32
    %c0_i32_1 = arith.constant 0 : i32
    return %arg0, %c0_i32, %c0_i32_0 : i32, i32, i32
  }
  func.func @transform_1(%arg0: i32) -> (i32, i32, i32) {
    %c0_i32 = arith.constant 0 : i32
    %c0_i32_0 = arith.constant 0 : i32
    %c0_i32_1 = arith.constant 0 : i32
    %c0_i32_2 = arith.constant 0 : i32
    return %c0_i32, %c0_i32_0, %c0_i32_1 : i32, i32, i32
  }
  func.func @transform_2(%arg0: i32) -> (i32, i32, i32) {
    %c0_i32 = arith.constant 0 : i32
    %c0_i32_0 = arith.constant 0 : i32
    %c0_i32_1 = arith.constant 0 : i32
    %c0_i32_2 = arith.constant 0 : i32
    return %c0_i32, %c0_i32_0, %c0_i32_1 : i32, i32, i32
  }
  func.func @transform_3(%arg0: i32) -> (i32, i32) {
    %c0_i32 = arith.constant 0 : i32
    %c0_i32_0 = arith.constant 0 : i32
    %c0_i32_1 = arith.constant 0 : i32
    return %c0_i32, %c0_i32_0 : i32, i32
  }
  func.func @transform_4(%arg0: i32) -> (i32, i32) {
    %c0_i32 = arith.constant 0 : i32
    %c0_i32_0 = arith.constant 0 : i32
    %c0_i32_1 = arith.constant 0 : i32
    return %c0_i32, %c0_i32_0 : i32, i32
  }
  func.func @transform_5(%arg0: i32) -> (i32, i32) {
    %c0_i32 = arith.constant 0 : i32
    %c0_i32_0 = arith.constant 0 : i32
    %c0_i32_1 = arith.constant 0 : i32
    return %c0_i32, %c0_i32_0 : i32, i32
  }
  func.func @transform_6(%arg0: i32) -> (i32, i32) {
    %c0_i32 = arith.constant 0 : i32
    %c0_i32_0 = arith.constant 0 : i32
    %c0_i32_1 = arith.constant 0 : i32
    return %c0_i32, %c0_i32_0 : i32, i32
  }
  func.func @transform_7(%arg0: i32) -> (i32, i32) {
    %c0_i32 = arith.constant 0 : i32
    %c0_i32_0 = arith.constant 0 : i32
    %c0_i32_1 = arith.constant 0 : i32
    return %c0_i32, %c0_i32_0 : i32, i32
  }
  func.func @transform_8(%arg0: i32) -> (i32, i32) {
    %c0_i32 = arith.constant 0 : i32
    %c0_i32_0 = arith.constant 0 : i32
    %c0_i32_1 = arith.constant 0 : i32
    return %c0_i32, %c0_i32_0 : i32, i32
  }
  func.func @transform_9(%arg0: i32) -> (i32, i32) {
    %c0_i32 = arith.constant 0 : i32
    %c0_i32_0 = arith.constant 0 : i32
    %c0_i32_1 = arith.constant 0 : i32
    return %c0_i32, %c0_i32_0 : i32, i32
  }
  func.func @transform_10(%arg0: i32) -> (i32, i32) {
    %c0_i32 = arith.constant 0 : i32
    %c0_i32_0 = arith.constant 0 : i32
    %c0_i32_1 = arith.constant 0 : i32
    return %c0_i32, %c0_i32_0 : i32, i32
  }
  func.func @transform_11(%arg0: i32) -> (i32, i32, i32) {
    %c0_i32 = arith.constant 0 : i32
    %c0_i32_0 = arith.constant 0 : i32
    %c0_i32_1 = arith.constant 0 : i32
    return %arg0, %c0_i32, %c0_i32_0 : i32, i32, i32
  }
}

</mosaic_0001>

<llo_original>
// kernel: tpu_custom_call.1
$region0: #{tpu_custom_call.1}
  #allocation0 [shape = 'u32[]', space=smem, size = 0x4, offset = 0x4, fixed_abs, tag = 'smem constant byte address 0x4 - core index']
  #allocation1 [shape = 'u32[144,128]{1,0:T(1,128)}', space=vmem, size = 0x12000, scoped, tag = 'internal scratch']
  %s0 = inlined_call_operand.hbm [shape: bf16[2,16,290], index: 0, kind: input, shape index: {}]
  %s1 = inlined_call_operand.hbm [shape: f32[9,1,256], index: 1, kind: input, shape index: {}]
  %s2 = inlined_call_operand.vmem [shape: bf16[9,16,16], index: 2, kind: input, shape index: {}]
  %s3 = inlined_call_operand.vmem [shape: f32[16,1], index: 3, kind: input, shape index: {}]
  %s4 = inlined_call_operand.vmem [shape: bf16[16,16], index: 4, kind: input, shape index: {}]
  %s5 = inlined_call_operand.vmem [shape: f32[16,1], index: 5, kind: input, shape index: {}]
  %s6 = inlined_call_operand.vmem [shape: bf16[8,16], index: 6, kind: input, shape index: {}]
  %s7 = inlined_call_operand.vmem [shape: bf16[8,16], index: 7, kind: input, shape index: {}]
  %s8 = inlined_call_operand.vmem [shape: f32[8,1], index: 8, kind: input, shape index: {}]
  %s9 = inlined_call_operand.vmem [shape: bf16[16,8], index: 9, kind: input, shape index: {}]
  %s10 = inlined_call_operand.vmem [shape: f32[16,1], index: 10, kind: input, shape index: {}]
  %s11 = inlined_call_operand.hbm [shape: f32[2,16,256], index: 11, kind: output, shape index: {}]
  %s12 = sld [smem:[#allocation0]]
  $region85: #{tpu_custom_call.1} parent=0
    _
  %s14 = ssub.s32 1, %s12
  %s15 = scalar_select 0, %s14, %s12
  $region1: #{tpu_custom_call.1} parent=0
    #allocation2 [shape = 'u8[24576]{0}', space=vmem, size = 0x6000, scoped, tag = 'input window, operand 0']
    #allocation3 [shape = 's32[2]{0}', space=sflag, size = 0x8, scoped, tag = 'scoped memory for tpu_custom_call.1']
    #allocation4 [shape = 's32[2]{0}', space=sflag, size = 0x8, scoped, tag = 'scoped memory for tpu_custom_call.1']
    #allocation5 [shape = 'u8[9216]{0}', space=vmem, size = 0x2400, scoped, tag = 'input window, operand 1, single buffered']
    #allocation6 [shape = 's32[1]{0}', space=sflag, size = 0x4, scoped, tag = 'scoped memory for tpu_custom_call.1']
    #allocation7 [shape = 'u8[32768]{0}', space=vmem, size = 0x8000, scoped, tag = 'output window, operand 0']
    %16 = vsyncpa [#allocation3], 0
    %s17 = scalar_lea.sflag [#allocation3], 1
    %18 = vsyncpa %s17, 0
    %19 = vsyncpa [#allocation6], 0
    %20 = vsyncpa [#allocation4], 0
    %s21 = scalar_lea.sflag [#allocation4], 1
    %22 = vsyncpa %s21, 0
    loop: start=0, step=1, limit=4
    $region2: #{tpu_custom_call.1} parent=1 // loop_pre_header
      _
    $region3: #{tpu_custom_call.1} parent=1 // loop_header
      %s24 = sphi 0, %s28
      %p25 = scmp.ge.s32.totalorder %s24, 4
      %s34 = sphi 0, %s36
      %s37 = sphi 0, %s34
      %s38 = sphi 0, %s37
      %s54 = sphi 0, %s38
      %s58 = sphi 0, %s58
      %s60 = sphi 0, %s58
      %s61 = sphi 0, %s60
      %s75 = sphi 0, %s61
      %s79 = sphi 0, %s79
      %s81 = sphi 0, %s79
      %s82 = sphi 0, %s81
      %s96 = sphi 0, %s82
      %s100 = sphi 0, %s100
      %s102 = sphi 0, %s100
      %s103 = sphi 0, %s102
      %s117 = sphi 0, %s103
      %s121 = sphi 0, %s121
      %s123 = sphi 0, %s121
      %s124 = sphi 0, %s123
      %s138 = sphi 0, %s124
      %s142 = sphi 0, %s142
      %s144 = sphi 0, %s142
      %s145 = sphi 0, %s144
      %s159 = sphi 0, %s145
      %s163 = sphi 0, %s163
      %s165 = sphi 0, %s163
      %s166 = sphi 0, %s165
      %s180 = sphi 0, %s166
      %s184 = sphi 0, %s184
      %s186 = sphi 0, %s184
      %s187 = sphi 0, %s186
      %s201 = sphi 0, %s187
      %s205 = sphi 0, %s205
      %s207 = sphi 0, %s205
      %s208 = sphi 0, %s207
      %s222 = sphi 0, %s208
      %s226 = sphi 0, %s226
      %s228 = sphi 0, %s226
      %s229 = sphi 0, %s228
      %s243 = sphi 0, %s229
      %s247 = sphi 0, %s247
      %s249 = sphi 0, %s247
      %s250 = sphi 0, %s249
      %s264 = sphi 0, %s250
      %s270 = sphi 0, %s272
      %s273 = sphi 0, %s270
      %s274 = sphi 0, %s273
      %s290 = sphi 0, %s274
    $region4: #{tpu_custom_call.1} parent=1 // loop_header_branch
      %27 = sbr.rel (%p25) target = $region8
    $region5: #{tpu_custom_call.1} parent=1 // loop_body
      %s29 = ssub.s32 %s24, 1
      %s30 = ssub.s32 %s24, 2
      %s31 = sadd.s32 %s24, 1
      %s32 = ssub.s32 %s24, %s31
      %p33 = scmp.eq.s32.totalorder %s32, 0
      %s35 = sadd.s32 %s34, 1
      %s36 = scalar_select %p33, %s34, %s35
      %p39 = pneg %p33
      %p40 = scmp.eq.s32.totalorder %s24, 1
      %p41 = por %p39, %p40
      %p42 = scmp.ne.s32.totalorder %s34, %s37
      %p43 = scmp.eq.s32.totalorder %s24, 0
      %p44 = por %p42, %p43
      %p45 = scmp.ne.s32.totalorder %s34, %s37
      %p46 = scmp.eq.s32.totalorder %s29, 1
      %p47 = por %p45, %p46
      %p48 = scmp.ne.s32.totalorder %s37, %s38
      %p49 = scmp.eq.s32.totalorder %s29, 0
      %p50 = por %p48, %p49
      %p51 = scmp.ne.s32.totalorder %s37, %s38
      %p52 = scmp.eq.s32.totalorder %s30, 1
      %p53 = por %p51, %p52
      %p55 = scmp.ne.s32.totalorder %s38, %s54
      %p56 = scmp.eq.s32.totalorder %s30, 0
      %p57 = por %p55, %p56
      %s59 = sadd.s32 %s58, 1
      %p62 = scmp.eq.s32.totalorder %s24, 1
      %p63 = scmp.ne.s32.totalorder %s58, %s60
      %p64 = scmp.eq.s32.totalorder %s24, 0
      %p65 = por %p63, %p64
      %p66 = scmp.ne.s32.totalorder %s58, %s60
      %p67 = scmp.eq.s32.totalorder %s29, 1
      %p68 = por %p66, %p67
      %p69 = scmp.ne.s32.totalorder %s60, %s61
      %p70 = scmp.eq.s32.totalorder %s29, 0
      %p71 = por %p69, %p70
      %p72 = scmp.ne.s32.totalorder %s60, %s61
      %p73 = scmp.eq.s32.totalorder %s30, 1
      %p74 = por %p72, %p73
      %p76 = scmp.ne.s32.totalorder %s61, %s75
      %p77 = scmp.eq.s32.totalorder %s30, 0
      %p78 = por %p76, %p77
      %s80 = sadd.s32 %s79, 1
      %p83 = scmp.eq.s32.totalorder %s24, 1
      %p84 = scmp.ne.s32.totalorder %s79, %s81
      %p85 = scmp.eq.s32.totalorder %s24, 0
      %p86 = por %p84, %p85
      %p87 = scmp.ne.s32.totalorder %s79, %s81
      %p88 = scmp.eq.s32.totalorder %s29, 1
      %p89 = por %p87, %p88
      %p90 = scmp.ne.s32.totalorder %s81, %s82
      %p91 = scmp.eq.s32.totalorder %s29, 0
      %p92 = por %p90, %p91
      %p93 = scmp.ne.s32.totalorder %s81, %s82
      %p94 = scmp.eq.s32.totalorder %s30, 1
      %p95 = por %p93, %p94
      %p97 = scmp.ne.s32.totalorder %s82, %s96
      %p98 = scmp.eq.s32.totalorder %s30, 0
      %p99 = por %p97, %p98
      %s101 = sadd.s32 %s100, 1
      %p104 = scmp.eq.s32.totalorder %s24, 1
      %p105 = scmp.ne.s32.totalorder %s100, %s102
      %p106 = scmp.eq.s32.totalorder %s24, 0
      %p107 = por %p105, %p106
      %p108 = scmp.ne.s32.totalorder %s100, %s102
      %p109 = scmp.eq.s32.totalorder %s29, 1
      %p110 = por %p108, %p109
      %p111 = scmp.ne.s32.totalorder %s102, %s103
      %p112 = scmp.eq.s32.totalorder %s29, 0
      %p113 = por %p111, %p112
      %p114 = scmp.ne.s32.totalorder %s102, %s103
      %p115 = scmp.eq.s32.totalorder %s30, 1
      %p116 = por %p114, %p115
      %p118 = scmp.ne.s32.totalorder %s103, %s117
      %p119 = scmp.eq.s32.totalorder %s30, 0
      %p120 = por %p118, %p119
      %s122 = sadd.s32 %s121, 1
      %p125 = scmp.eq.s32.totalorder %s24, 1
      %p126 = scmp.ne.s32.totalorder %s121, %s123
      %p127 = scmp.eq.s32.totalorder %s24, 0
      %p128 = por %p126, %p127
      %p129 = scmp.ne.s32.totalorder %s121, %s123
      %p130 = scmp.eq.s32.totalorder %s29, 1
      %p131 = por %p129, %p130
      %p132 = scmp.ne.s32.totalorder %s123, %s124
      %p133 = scmp.eq.s32.totalorder %s29, 0
      %p134 = por %p132, %p133
      %p135 = scmp.ne.s32.totalorder %s123, %s124
      %p136 = scmp.eq.s32.totalorder %s30, 1
      %p137 = por %p135, %p136
      %p139 = scmp.ne.s32.totalorder %s124, %s138
      %p140 = scmp.eq.s32.totalorder %s30, 0
      %p141 = por %p139, %p140
      %s143 = sadd.s32 %s142, 1
      %p146 = scmp.eq.s32.totalorder %s24, 1
      %p147 = scmp.ne.s32.totalorder %s142, %s144
      %p148 = scmp.eq.s32.totalorder %s24, 0
      %p149 = por %p147, %p148
      %p150 = scmp.ne.s32.totalorder %s142, %s144
      %p151 = scmp.eq.s32.totalorder %s29, 1
      %p152 = por %p150, %p151
      %p153 = scmp.ne.s32.totalorder %s144, %s145
      %p154 = scmp.eq.s32.totalorder %s29, 0
      %p155 = por %p153, %p154
      %p156 = scmp.ne.s32.totalorder %s144, %s145
      %p157 = scmp.eq.s32.totalorder %s30, 1
      %p158 = por %p156, %p157
      %p160 = scmp.ne.s32.totalorder %s145, %s159
      %p161 = scmp.eq.s32.totalorder %s30, 0
      %p162 = por %p160, %p161
      %s164 = sadd.s32 %s163, 1
      %p167 = scmp.eq.s32.totalorder %s24, 1
      %p168 = scmp.ne.s32.totalorder %s163, %s165
      %p169 = scmp.eq.s32.totalorder %s24, 0
      %p170 = por %p168, %p169
      %p171 = scmp.ne.s32.totalorder %s163, %s165
      %p172 = scmp.eq.s32.totalorder %s29, 1
      %p173 = por %p171, %p172
      %p174 = scmp.ne.s32.totalorder %s165, %s166
      %p175 = scmp.eq.s32.totalorder %s29, 0
      %p176 = por %p174, %p175
      %p177 = scmp.ne.s32.totalorder %s165, %s166
      %p178 = scmp.eq.s32.totalorder %s30, 1
      %p179 = por %p177, %p178
      %p181 = scmp.ne.s32.totalorder %s166, %s180
      %p182 = scmp.eq.s32.totalorder %s30, 0
      %p183 = por %p181, %p182
      %s185 = sadd.s32 %s184, 1
      %p188 = scmp.eq.s32.totalorder %s24, 1
      %p189 = scmp.ne.s32.totalorder %s184, %s186
      %p190 = scmp.eq.s32.totalorder %s24, 0
      %p191 = por %p189, %p190
      %p192 = scmp.ne.s32.totalorder %s184, %s186
      %p193 = scmp.eq.s32.totalorder %s29, 1
      %p194 = por %p192, %p193
      %p195 = scmp.ne.s32.totalorder %s186, %s187
      %p196 = scmp.eq.s32.totalorder %s29, 0
      %p197 = por %p195, %p196
      %p198 = scmp.ne.s32.totalorder %s186, %s187
      %p199 = scmp.eq.s32.totalorder %s30, 1
      %p200 = por %p198, %p199
      %p202 = scmp.ne.s32.totalorder %s187, %s201
      %p203 = scmp.eq.s32.totalorder %s30, 0
      %p204 = por %p202, %p203
      %s206 = sadd.s32 %s205, 1
      %p209 = scmp.eq.s32.totalorder %s24, 1
      %p210 = scmp.ne.s32.totalorder %s205, %s207
      %p211 = scmp.eq.s32.totalorder %s24, 0
      %p212 = por %p210, %p211
      %p213 = scmp.ne.s32.totalorder %s205, %s207
      %p214 = scmp.eq.s32.totalorder %s29, 1
      %p215 = por %p213, %p214
      %p216 = scmp.ne.s32.totalorder %s207, %s208
      %p217 = scmp.eq.s32.totalorder %s29, 0
      %p218 = por %p216, %p217
      %p219 = scmp.ne.s32.totalorder %s207, %s208
      %p220 = scmp.eq.s32.totalorder %s30, 1
      %p221 = por %p219, %p220
      %p223 = scmp.ne.s32.totalorder %s208, %s222
      %p224 = scmp.eq.s32.totalorder %s30, 0
      %p225 = por %p223, %p224
      %s227 = sadd.s32 %s226, 1
      %p230 = scmp.eq.s32.totalorder %s24, 1
      %p231 = scmp.ne.s32.totalorder %s226, %s228
      %p232 = scmp.eq.s32.totalorder %s24, 0
      %p233 = por %p231, %p232
      %p234 = scmp.ne.s32.totalorder %s226, %s228
      %p235 = scmp.eq.s32.totalorder %s29, 1
      %p236 = por %p234, %p235
      %p237 = scmp.ne.s32.totalorder %s228, %s229
      %p238 = scmp.eq.s32.totalorder %s29, 0
      %p239 = por %p237, %p238
      %p240 = scmp.ne.s32.totalorder %s228, %s229
      %p241 = scmp.eq.s32.totalorder %s30, 1
      %p242 = por %p240, %p241
      %p244 = scmp.ne.s32.totalorder %s229, %s243
      %p245 = scmp.eq.s32.totalorder %s30, 0
      %p246 = por %p244, %p245
      %s248 = sadd.s32 %s247, 1
      %p251 = scmp.eq.s32.totalorder %s24, 1
      %p252 = scmp.ne.s32.totalorder %s247, %s249
      %p253 = scmp.eq.s32.totalorder %s24, 0
      %p254 = por %p252, %p253
      %p255 = scmp.ne.s32.totalorder %s247, %s249
      %p256 = scmp.eq.s32.totalorder %s29, 1
      %p257 = por %p255, %p256
      %p258 = scmp.ne.s32.totalorder %s249, %s250
      %p259 = scmp.eq.s32.totalorder %s29, 0
      %p260 = por %p258, %p259
      %p261 = scmp.ne.s32.totalorder %s249, %s250
      %p262 = scmp.eq.s32.totalorder %s30, 1
      %p263 = por %p261, %p262
      %p265 = scmp.ne.s32.totalorder %s250, %s264
      %p266 = scmp.eq.s32.totalorder %s30, 0
      %p267 = por %p265, %p266
      %s268 = ssub.s32 %s24, %s31
      %p269 = scmp.eq.s32.totalorder %s268, 0
      %s271 = sadd.s32 %s270, 1
      %s272 = scalar_select %p269, %s270, %s271
      %p275 = pneg %p269
      %p276 = scmp.eq.s32.totalorder %s24, 1
      %p277 = por %p275, %p276
      %p278 = scmp.ne.s32.totalorder %s270, %s273
      %p279 = scmp.eq.s32.totalorder %s24, 0
      %p280 = por %p278, %p279
      %p281 = scmp.ne.s32.totalorder %s270, %s273
      %p282 = scmp.eq.s32.totalorder %s29, 1
      %p283 = por %p281, %p282
      %p284 = scmp.ne.s32.totalorder %s273, %s274
      %p285 = scmp.eq.s32.totalorder %s29, 0
      %p286 = por %p284, %p285
      %p287 = scmp.ne.s32.totalorder %s273, %s274
      %p288 = scmp.eq.s32.totalorder %s30, 1
      %p289 = por %p287, %p288
      %p291 = scmp.ne.s32.totalorder %s274, %s290
      %p292 = scmp.eq.s32.totalorder %s30, 0
      %p293 = por %p291, %p292
      %p294 = scmp.le.s32.totalorder 1, %s24
      %p295 = scmp.lt.s32.totalorder %s24, 3
      %p296 = pnand %p294, %p295
      %p297 = pneg %p296
      // Predicated region
      $region9: #{tpu_custom_call.1} parent=5 // pred_check
        _
      $region10: #{tpu_custom_call.1} parent=5 // pred_check_branch
        %299 = sbr.rel (%p296) target = $region12
      $region11: #{tpu_custom_call.1} parent=5 // pred_region
        %s300 = ssub.s32 %s24, 1
        // Predicated region
        $region13: #{tpu_custom_call.1} parent=11 // pred_check
          %p301 = pneg %p71
        $region14: #{tpu_custom_call.1} parent=11 // pred_check_branch
          %303 = sbr.rel (%p301) target = $region16
        $region15: #{tpu_custom_call.1} parent=11 // pred_region
          %s305 = ssub.s32 288, 288
          %306 = vsyncadd [#allocation6], %s305
          %s307 = sshll.u32 [#allocation5], 4
          %s308 = int_to_ptr.vmem [resolvable:$true] %s307
          %313 = dma.hbm_to_vmem [thread:$0]  %s1, 288, %s308, [#allocation6], 32, 32, 2
        $region16: #{tpu_custom_call.1} parent=11 // pred_fallthru
          _
        // Predicated region
        $region17: #{tpu_custom_call.1} parent=11 // pred_check
          %p314 = pneg %p92
        $region18: #{tpu_custom_call.1} parent=11 // pred_check_branch
          %316 = sbr.rel (%p314) target = $region20
        $region19: #{tpu_custom_call.1} parent=11 // pred_region
          _
        $region20: #{tpu_custom_call.1} parent=11 // pred_fallthru
          _
        // Predicated region
        $region21: #{tpu_custom_call.1} parent=11 // pred_check
          %p317 = pneg %p113
        $region22: #{tpu_custom_call.1} parent=11 // pred_check_branch
          %319 = sbr.rel (%p317) target = $region24
        $region23: #{tpu_custom_call.1} parent=11 // pred_region
          _
        $region24: #{tpu_custom_call.1} parent=11 // pred_fallthru
          _
        // Predicated region
        $region25: #{tpu_custom_call.1} parent=11 // pred_check
          %p320 = pneg %p134
        $region26: #{tpu_custom_call.1} parent=11 // pred_check_branch
          %322 = sbr.rel (%p320) target = $region28
        $region27: #{tpu_custom_call.1} parent=11 // pred_region
          _
        $region28: #{tpu_custom_call.1} parent=11 // pred_fallthru
          _
        // Predicated region
        $region29: #{tpu_custom_call.1} parent=11 // pred_check
          %p323 = pneg %p155
        $region30: #{tpu_custom_call.1} parent=11 // pred_check_branch
          %325 = sbr.rel (%p323) target = $region32
        $region31: #{tpu_custom_call.1} parent=11 // pred_region
          _
        $region32: #{tpu_custom_call.1} parent=11 // pred_fallthru
          _
        // Predicated region
        $region33: #{tpu_custom_call.1} parent=11 // pred_check
          %p326 = pneg %p176
        $region34: #{tpu_custom_call.1} parent=11 // pred_check_branch
          %328 = sbr.rel (%p326) target = $region36
        $region35: #{tpu_custom_call.1} parent=11 // pred_region
          _
        $region36: #{tpu_custom_call.1} parent=11 // pred_fallthru
          _
        // Predicated region
        $region37: #{tpu_custom_call.1} parent=11 // pred_check
          %p329 = pneg %p197
        $region38: #{tpu_custom_call.1} parent=11 // pred_check_branch
          %331 = sbr.rel (%p329) target = $region40
        $region39: #{tpu_custom_call.1} parent=11 // pred_region
          _
        $region40: #{tpu_custom_call.1} parent=11 // pred_fallthru
          _
        // Predicated region
        $region41: #{tpu_custom_call.1} parent=11 // pred_check
          %p332 = pneg %p218
        $region42: #{tpu_custom_call.1} parent=11 // pred_check_branch
          %334 = sbr.rel (%p332) target = $region44
        $region43: #{tpu_custom_call.1} parent=11 // pred_region
          _
        $region44: #{tpu_custom_call.1} parent=11 // pred_fallthru
          _
        // Predicated region
        $region45: #{tpu_custom_call.1} parent=11 // pred_check
          %p335 = pneg %p239
        $region46: #{tpu_custom_call.1} parent=11 // pred_check_branch
          %337 = sbr.rel (%p335) target = $region48
        $region47: #{tpu_custom_call.1} parent=11 // pred_region
          _
        $region48: #{tpu_custom_call.1} parent=11 // pred_fallthru
          _
        // Predicated region
        $region49: #{tpu_custom_call.1} parent=11 // pred_check
          %p338 = pneg %p260
        $region50: #{tpu_custom_call.1} parent=11 // pred_check_branch
          %340 = sbr.rel (%p338) target = $region52
        $region51: #{tpu_custom_call.1} parent=11 // pred_region
          _
        $region52: #{tpu_custom_call.1} parent=11 // pred_fallthru
          _
      $region12: #{tpu_custom_call.1} parent=5 // pred_fallthru
        _
      %p341 = scmp.lt.s32.totalorder %s24, 2
      // Predicated region
      $region53: #{tpu_custom_call.1} parent=5 // pred_check
        %p342 = pneg %p341
      $region54: #{tpu_custom_call.1} parent=5 // pred_check_branch
        %344 = sbr.rel (%p342) target = $region56
      $region55: #{tpu_custom_call.1} parent=5 // pred_region
        // Predicated region
        $region57: #{tpu_custom_call.1} parent=55 // pred_check
          %p345 = pneg %p44
        $region58: #{tpu_custom_call.1} parent=55 // pred_check_branch
          %347 = sbr.rel (%p345) target = $region60
        $region59: #{tpu_custom_call.1} parent=55 // pred_region
          %s348 = sand.u32 %s34, 1
          %s349 = scalar_lea.sflag [#allocation3], %s348
          %s350 = sand.u32 %s34, 1
          %s351 = smul.addr %s350, 24
          %s352 = scalar_lea.vmem [#allocation2], %s351
          %s354 = ssub.s32 384, 384
          %355 = vsyncadd %s349, %s354
          %s356 = smul.addr %s24, 6
          %s357 = smul.addr %s356, 64
          %s358 = scalar_lea.hbm %s0, %s357
          %s359 = sshll.u32 %s352, 4
          %s360 = int_to_ptr.vmem [resolvable:$true] %s359
          %365 = dma.hbm_to_vmem [thread:$0]  %s358, 384, %s360, %s349, 192, 192, 12
        $region60: #{tpu_custom_call.1} parent=55 // pred_fallthru
          _
      $region56: #{tpu_custom_call.1} parent=5 // pred_fallthru
        _
      %p366 = scmp.le.s32.totalorder 1, %s24
      %p367 = scmp.lt.s32.totalorder %s24, 3
      %p368 = pnand %p366, %p367
      %p369 = pneg %p368
      // Predicated region
      $region61: #{tpu_custom_call.1} parent=5 // pred_check
        _
      $region62: #{tpu_custom_call.1} parent=5 // pred_check_branch
        %371 = sbr.rel (%p368) target = $region64
      $region63: #{tpu_custom_call.1} parent=5 // pred_region
        %s372 = ssub.s32 %s24, 1
        %s373 = sand.u32 %s37, 1
        %s374 = scalar_lea.sflag [#allocation3], %s373
        %s375 = sand.u32 %s37, 1
        %s376 = smul.addr %s375, 24
        %s377 = scalar_lea.vmem [#allocation2], %s376
        // Predicated region
        $region65: #{tpu_custom_call.1} parent=63 // pred_check
          %p378 = pneg %p50
        $region66: #{tpu_custom_call.1} parent=63 // pred_check_branch
          %380 = sbr.rel (%p378) target = $region68
        $region67: #{tpu_custom_call.1} parent=63 // pred_region
          %381 = dma.done %s374, 384
        $region68: #{tpu_custom_call.1} parent=63 // pred_fallthru
          _
        // Predicated region
        $region69: #{tpu_custom_call.1} parent=63 // pred_check
          %p382 = pneg %p71
        $region70: #{tpu_custom_call.1} parent=63 // pred_check_branch
          %384 = sbr.rel (%p382) target = $region72
        $region71: #{tpu_custom_call.1} parent=63 // pred_region
          %385 = dma.done [#allocation6], 288
        $region72: #{tpu_custom_call.1} parent=63 // pred_fallthru
          _
        %s386 = sand.u32 %s37, 1
        %s387 = scalar_lea.sflag [#allocation3], %s386
        %s388 = sand.u32 %s37, 1
        %s389 = smul.addr %s388, 24
        %s390 = scalar_lea.vmem [#allocation2], %s389
        %p391 = pneg %p50
        %p392 = pneg %p47
        %p393 = pneg %p71
        %p394 = pneg %p68
        %p395 = pneg %p92
        %p396 = pneg %p89
        %p397 = pneg %p113
        %p398 = pneg %p110
        %p399 = pneg %p134
        %p400 = pneg %p131
        %p401 = pneg %p155
        %p402 = pneg %p152
        %p403 = pneg %p176
        %p404 = pneg %p173
        %p405 = pneg %p197
        %p406 = pneg %p194
        %p407 = pneg %p218
        %p408 = pneg %p215
        %p409 = pneg %p239
        %p410 = pneg %p236
        %p411 = pneg %p260
        %p412 = pneg %p257
        %p413 = pneg %p286
        %p414 = pneg %p283
        %s415 = sand.u32 %s273, 1
        %s416 = scalar_lea.sflag [#allocation4], %s415
        %s417 = sand.u32 %s273, 1
        %s418 = smul.addr %s417, 32
        %s419 = scalar_lea.vmem [#allocation7], %s418
        %v421 = vld [vmem:[%s377] sm:$0xff]
        %v422 = vld [vmem:[%s377 + $0x8] sm:$0xf]
        %v423 = vld [vmem:[%s377 + $0xc] sm:$0xff]
        %v424 = vld [vmem:[%s377 + $0x14] sm:$0xf]
        %v425 = vld [vmem:[%s2] sm:$0xf]
        %v426 = vld [vmem:[%s2 + $0x4] sm:$0xf]
        %v429 = vunpack.c.l.b16 %v425
        %v430 = vunpack.c.l.b16 %v426
        %v431 = vpack.c.b16 %v430, %v429
        %v434 = vunpack.c.l.b16 %v421
        %v435 = vunpack.c.h.b16 %v421
        %v436 = vunpack.c.l.b16 %v423
        %v437 = vunpack.c.h.b16 %v423
        %v438 = vpack.c.b16 %v436, %v434
        %v439 = vpack.c.b16 %v437, %v435
        %vm442 = vcmask 130048
        %v444 = vsel %vm442, %v431, 0
        %446 = vmatprep.subr.bf16.mxu0 %v439
        %447 = vmatpush1.bf16.msra.mxu0 %v438
        %448 = vmatprep.subr.bf16.mxu0 0
        %449 = vmatpush1.bf16.msra.mxu0 0
        %450 = vmatprep.subr.bf16.mxu0 0
        %451 = vmatpush1.bf16.msra.mxu0 0
        %452 = vmatprep.subr.bf16.mxu0 0
        %453 = vmatpush1.bf16.msra.mxu0 0
        %454 = vmatprep.subr.bf16.mxu0 0
        %455 = vmatpush1.bf16.msra.mxu0 0
        %456 = vmatprep.subr.bf16.mxu0 0
        %457 = vmatpush1.bf16.msra.mxu0 0
        %458 = vmatprep.subr.bf16.mxu0 0
        %459 = vmatpush1.bf16.msra.mxu0 0
        %460 = vmatprep.subr.bf16.mxu0 0
        %461 = vmatpush1.bf16.msra.mxu0 0
        %462 = vmatprep.subr.bf16.mxu0 0
        %463 = vmatpush1.bf16.msra.mxu0 0
        %464 = vmatprep.subr.bf16.mxu0 0
        %465 = vmatpush1.bf16.msra.mxu0 0
        %466 = vmatprep.subr.bf16.mxu0 0
        %467 = vmatpush1.bf16.msra.mxu0 0
        %468 = vmatprep.subr.bf16.mxu0 0
        %469 = vmatpush1.bf16.msra.mxu0 0
        %470 = vmatprep.subr.bf16.mxu0 0
        %471 = vmatpush1.bf16.msra.mxu0 0
        %472 = vmatprep.subr.bf16.mxu0 0
        %473 = vmatpush1.bf16.msra.mxu0 0
        %474 = vmatprep.subr.bf16.mxu0 0
        %475 = vmatpush1.bf16.msra.mxu0 0
        %476 = vmatprep.subr.bf16.mxu0 0
        %477 = vmatpush1.bf16.msra.mxu0 0
        %478 = vmatprep.mubr.bf16.mxu0 0
        %479 = vmatmul.mubr.bf16.gmra.mrb[0].mxu0 %v444
        %v480 = vpop.f32.mrb[0].mxu0
        %v481 = vadd.f32 0.0, %v480
        %v482 = vpop.f32.mrb[0].mxu0
        %v483 = vadd.f32 0.0, %v482
        %v484 = vpop.f32.mrb[0].mxu0
        %v485 = vadd.f32 0.0, %v484
        %v486 = vpop.f32.mrb[0].mxu0
        %v487 = vadd.f32 0.0, %v486
        %488 = vdwg.mxu0
        %v489 = vld [vmem:[#allocation5] sm:$0x3]
        %v491 = vlaneseq
        %v492 = vshrl.u32 %v491, 7
        %v493 = vsub.s32 0, %v492
        %v494 = vrot.slane %v489, %v493
        %v495 = vlaneseq
        %v496 = vshrl.u32 %v495, 7
        %v497 = vsub.s32 1, %v496
        %v498 = vrot.slane %v489, %v497
        %v501 = vmul.f32 %v481, %v494
        %v502 = vmul.f32 %v483, %v498
        %v503 = vmul.f32 %v485, %v494
        %v504 = vmul.f32 %v487, %v498
        %v505 = vadd.f32 %v501, 0.0
        %v506 = vadd.f32 %v502, 0.0
        %v507 = vadd.f32 %v503, 0.0
        %v508 = vadd.f32 %v504, 0.0
        %s509 = scalar_lea.vmem %s2, 8
        %v510 = vld [vmem:[%s509] sm:$0xf]
        %v511 = vld [vmem:[%s509 + $0x4] sm:$0xf]
        %v514 = vunpack.c.l.b16 %v510
        %v515 = vunpack.c.l.b16 %v511
        %v516 = vpack.c.b16 %v515, %v514
        %v519 = vunpack.c.l.b16 %v422
        %v520 = vunpack.c.l.b16 %v424
        %v521 = vpack.c.b16 %v520, %v519
        %v524 = vsel %vm442, %v516, 0
        %526 = vmatprep.subr.bf16.mxu0 %v439
        %527 = vmatpush1.bf16.msra.mxu0 %v438
        %528 = vmatprep.subr.bf16.mxu0 0
        %529 = vmatpush1.bf16.msra.mxu0 0
        %530 = vmatprep.subr.bf16.mxu0 0
        %531 = vmatpush1.bf16.msra.mxu0 0
        %532 = vmatprep.subr.bf16.mxu0 0
        %533 = vmatpush1.bf16.msra.mxu0 0
        %534 = vmatprep.subr.bf16.mxu0 0
        %535 = vmatpush1.bf16.msra.mxu0 0
        %536 = vmatprep.subr.bf16.mxu0 0
        %537 = vmatpush1.bf16.msra.mxu0 0
        %538 = vmatprep.subr.bf16.mxu0 0
        %539 = vmatpush1.bf16.msra.mxu0 0
        %540 = vmatprep.subr.bf16.mxu0 0
        %541 = vmatpush1.bf16.msra.mxu0 0
        %542 = vmatprep.subr.bf16.mxu0 0
        %543 = vmatpush1.bf16.msra.mxu0 0
        %544 = vmatprep.subr.bf16.mxu0 0
        %545 = vmatpush1.bf16.msra.mxu0 0
        %546 = vmatprep.subr.bf16.mxu0 0
        %547 = vmatpush1.bf16.msra.mxu0 0
        %548 = vmatprep.subr.bf16.mxu0 0
        %549 = vmatpush1.bf16.msra.mxu0 0
        %550 = vmatprep.subr.bf16.mxu0 0
        %551 = vmatpush1.bf16.msra.mxu0 0
        %552 = vmatprep.subr.bf16.mxu0 0
        %553 = vmatpush1.bf16.msra.mxu0 0
        %554 = vmatprep.subr.bf16.mxu0 0
        %555 = vmatpush1.bf16.msra.mxu0 0
        %556 = vmatprep.subr.bf16.mxu0 0
        %557 = vmatpush1.bf16.msra.mxu0 0
        %558 = vmatprep.mubr.bf16.mxu0 0
        %559 = vmatmul.mubr.bf16.gmra.mrb[0].mxu0 %v524
        %v560 = vpop.f32.mrb[0].mxu0
        %v561 = vadd.f32 0.0, %v560
        %v562 = vpop.f32.mrb[0].mxu0
        %v563 = vadd.f32 0.0, %v562
        %v564 = vpop.f32.mrb[0].mxu0
        %v565 = vadd.f32 0.0, %v564
        %v566 = vpop.f32.mrb[0].mxu0
        %v567 = vadd.f32 0.0, %v566
        %568 = vdwg.mxu0
        %569 = vmatprep.subr.bf16.mxu0 0
        %570 = vmatpush1.bf16.msra.mxu0 %v521
        %571 = vmatprep.subr.bf16.mxu0 0
        %572 = vmatpush1.bf16.msra.mxu0 0
        %573 = vmatprep.subr.bf16.mxu0 0
        %574 = vmatpush1.bf16.msra.mxu0 0
        %575 = vmatprep.subr.bf16.mxu0 0
        %576 = vmatpush1.bf16.msra.mxu0 0
        %577 = vmatprep.subr.bf16.mxu0 0
        %578 = vmatpush1.bf16.msra.mxu0 0
        %579 = vmatprep.subr.bf16.mxu0 0
        %580 = vmatpush1.bf16.msra.mxu0 0
        %581 = vmatprep.subr.bf16.mxu0 0
        %582 = vmatpush1.bf16.msra.mxu0 0
        %583 = vmatprep.subr.bf16.mxu0 0
        %584 = vmatpush1.bf16.msra.mxu0 0
        %585 = vmatprep.subr.bf16.mxu0 0
        %586 = vmatpush1.bf16.msra.mxu0 0
        %587 = vmatprep.subr.bf16.mxu0 0
        %588 = vmatpush1.bf16.msra.mxu0 0
        %589 = vmatprep.subr.bf16.mxu0 0
        %590 = vmatpush1.bf16.msra.mxu0 0
        %591 = vmatprep.subr.bf16.mxu0 0
        %592 = vmatpush1.bf16.msra.mxu0 0
        %593 = vmatprep.subr.bf16.mxu0 0
        %594 = vmatpush1.bf16.msra.mxu0 0
        %595 = vmatprep.subr.bf16.mxu0 0
        %596 = vmatpush1.bf16.msra.mxu0 0
        %597 = vmatprep.subr.bf16.mxu0 0
        %598 = vmatpush1.bf16.msra.mxu0 0
        %599 = vmatprep.subr.bf16.mxu0 0
        %600 = vmatpush1.bf16.msra.mxu0 0
        %601 = vmatprep.mubr.bf16.mxu0 0
        %602 = vmatmul.mubr.bf16.gmra.mrb[0].mxu0 %v524
        %v603 = vpop.f32.mrb[0].mxu0
        %v604 = vadd.f32 0.0, %v603
        %v605 = vpop.f32.mrb[0].mxu0
        %v606 = vpop.f32.mrb[0].mxu0
        %v607 = vadd.f32 0.0, %v606
        %v608 = vpop.f32.mrb[0].mxu0
        %609 = vdwg.mxu0
        %s610 = scalar_lea.vmem [#allocation5], 2
        %v611 = vld [vmem:[%s610] sm:$0x3]
        %v613 = vlaneseq
        %v614 = vshrl.u32 %v613, 7
        %v615 = vsub.s32 0, %v614
        %v616 = vrot.slane %v611, %v615
        %v617 = vlaneseq
        %v618 = vshrl.u32 %v617, 7
        %v619 = vsub.s32 1, %v618
        %v620 = vrot.slane %v611, %v619
        %621 = vrot.lane.b32.xlu0 %v616, 1
        %v622 = vpop.permute.xlu0 %621
        %623 = vrot.lane.b32.xlu0 %v620, 1
        %v624 = vpop.permute.xlu0 %623
        %vm625 = vcmask 7168
        %v626 = vsel %vm625, %v622, %v624
        %v630 = vmul.f32 %v561, %v622
        %v631 = vmul.f32 %v563, %v626
        %v632 = vmul.f32 %v604, %v624
        %v633 = vmul.f32 %v565, %v622
        %v634 = vmul.f32 %v567, %v626
        %v635 = vmul.f32 %v607, %v624
        %642 = vrot.lane.b32.xlu0 %v630, 127
        %v643 = vpop.permute.xlu0 %642
        %644 = vrot.lane.b32.xlu0 %v631, 127
        %v645 = vpop.permute.xlu0 %644
        %646 = vrot.lane.b32.xlu0 %v632, 127
        %v647 = vpop.permute.xlu0 %646
        %648 = vrot.lane.b32.xlu0 %v633, 127
        %v649 = vpop.permute.xlu0 %648
        %650 = vrot.lane.b32.xlu0 %v634, 127
        %v651 = vpop.permute.xlu0 %650
        %652 = vrot.lane.b32.xlu0 %v635, 127
        %v653 = vpop.permute.xlu0 %652
        %vm654 = vcmask 1039360
        %v655 = vsel %vm654, %v643, %v645
        %v656 = vsel %vm654, %v645, %v647
        %v657 = vsel %vm654, %v649, %v651
        %v658 = vsel %vm654, %v651, %v653
        %v663 = vadd.f32 %v505, %v655
        %v664 = vadd.f32 %v506, %v656
        %v665 = vadd.f32 %v507, %v657
        %v666 = vadd.f32 %v508, %v658
        %s667 = scalar_lea.vmem %s2, 16
        %v668 = vld [vmem:[%s667] sm:$0xf]
        %v669 = vld [vmem:[%s667 + $0x4] sm:$0xf]
        %v672 = vunpack.c.l.b16 %v668
        %v673 = vunpack.c.l.b16 %v669
        %v674 = vpack.c.b16 %v673, %v672
        %v676 = vsel %vm442, %v674, 0
        %678 = vmatprep.subr.bf16.mxu0 %v439
        %679 = vmatpush1.bf16.msra.mxu0 %v438
        %680 = vmatprep.subr.bf16.mxu0 0
        %681 = vmatpush1.bf16.msra.mxu0 0
        %682 = vmatprep.subr.bf16.mxu0 0
        %683 = vmatpush1.bf16.msra.mxu0 0
        %684 = vmatprep.subr.bf16.mxu0 0
        %685 = vmatpush1.bf16.msra.mxu0 0
        %686 = vmatprep.subr.bf16.mxu0 0
        %687 = vmatpush1.bf16.msra.mxu0 0
        %688 = vmatprep.subr.bf16.mxu0 0
        %689 = vmatpush1.bf16.msra.mxu0 0
        %690 = vmatprep.subr.bf16.mxu0 0
        %691 = vmatpush1.bf16.msra.mxu0 0
        %692 = vmatprep.subr.bf16.mxu0 0
        %693 = vmatpush1.bf16.msra.mxu0 0
        %694 = vmatprep.subr.bf16.mxu0 0
        %695 = vmatpush1.bf16.msra.mxu0 0
        %696 = vmatprep.subr.bf16.mxu0 0
        %697 = vmatpush1.bf16.msra.mxu0 0
        %698 = vmatprep.subr.bf16.mxu0 0
        %699 = vmatpush1.bf16.msra.mxu0 0
        %700 = vmatprep.subr.bf16.mxu0 0
        %701 = vmatpush1.bf16.msra.mxu0 0
        %702 = vmatprep.subr.bf16.mxu0 0
        %703 = vmatpush1.bf16.msra.mxu0 0
        %704 = vmatprep.subr.bf16.mxu0 0
        %705 = vmatpush1.bf16.msra.mxu0 0
        %706 = vmatprep.subr.bf16.mxu0 0
        %707 = vmatpush1.bf16.msra.mxu0 0
        %708 = vmatprep.subr.bf16.mxu0 0
        %709 = vmatpush1.bf16.msra.mxu0 0
        %710 = vmatprep.mubr.bf16.mxu0 0
        %711 = vmatmul.mubr.bf16.gmra.mrb[0].mxu0 %v676
        %v712 = vpop.f32.mrb[0].mxu0
        %v713 = vadd.f32 0.0, %v712
        %v714 = vpop.f32.mrb[0].mxu0
        %v715 = vadd.f32 0.0, %v714
        %v716 = vpop.f32.mrb[0].mxu0
        %v717 = vadd.f32 0.0, %v716
        %v718 = vpop.f32.mrb[0].mxu0
        %v719 = vadd.f32 0.0, %v718
        %720 = vdwg.mxu0
        %721 = vmatprep.subr.bf16.mxu0 0
        %722 = vmatpush1.bf16.msra.mxu0 %v521
        %723 = vmatprep.subr.bf16.mxu0 0
        %724 = vmatpush1.bf16.msra.mxu0 0
        %725 = vmatprep.subr.bf16.mxu0 0
        %726 = vmatpush1.bf16.msra.mxu0 0
        %727 = vmatprep.subr.bf16.mxu0 0
        %728 = vmatpush1.bf16.msra.mxu0 0
        %729 = vmatprep.subr.bf16.mxu0 0
        %730 = vmatpush1.bf16.msra.mxu0 0
        %731 = vmatprep.subr.bf16.mxu0 0
        %732 = vmatpush1.bf16.msra.mxu0 0
        %733 = vmatprep.subr.bf16.mxu0 0
        %734 = vmatpush1.bf16.msra.mxu0 0
        %735 = vmatprep.subr.bf16.mxu0 0
        %736 = vmatpush1.bf16.msra.mxu0 0
        %737 = vmatprep.subr.bf16.mxu0 0
        %738 = vmatpush1.bf16.msra.mxu0 0
        %739 = vmatprep.subr.bf16.mxu0 0
        %740 = vmatpush1.bf16.msra.mxu0 0
        %741 = vmatprep.subr.bf16.mxu0 0
        %742 = vmatpush1.bf16.msra.mxu0 0
        %743 = vmatprep.subr.bf16.mxu0 0
        %744 = vmatpush1.bf16.msra.mxu0 0
        %745 = vmatprep.subr.bf16.mxu0 0
        %746 = vmatpush1.bf16.msra.mxu0 0
        %747 = vmatprep.subr.bf16.mxu0 0
        %748 = vmatpush1.bf16.msra.mxu0 0
        %749 = vmatprep.subr.bf16.mxu0 0
        %750 = vmatpush1.bf16.msra.mxu0 0
        %751 = vmatprep.subr.bf16.mxu0 0
        %752 = vmatpush1.bf16.msra.mxu0 0
        %753 = vmatprep.mubr.bf16.mxu0 0
        %754 = vmatmul.mubr.bf16.gmra.mrb[0].mxu0 %v676
        %v755 = vpop.f32.mrb[0].mxu0
        %v756 = vadd.f32 0.0, %v755
        %v757 = vpop.f32.mrb[0].mxu0
        %v758 = vpop.f32.mrb[0].mxu0
        %v759 = vadd.f32 0.0, %v758
        %v760 = vpop.f32.mrb[0].mxu0
        %761 = vdwg.mxu0
        %s762 = scalar_lea.vmem [#allocation5], 4
        %v763 = vld [vmem:[%s762] sm:$0x3]
        %v765 = vlaneseq
        %v766 = vshrl.u32 %v765, 7
        %v767 = vsub.s32 0, %v766
        %v768 = vrot.slane %v763, %v767
        %v769 = vlaneseq
        %v770 = vshrl.u32 %v769, 7
        %v771 = vsub.s32 1, %v770
        %v772 = vrot.slane %v763, %v771
        %773 = vrot.lane.b32.xlu0 %v768, 2
        %v774 = vpop.permute.xlu0 %773
        %775 = vrot.lane.b32.xlu0 %v772, 2
        %v776 = vpop.permute.xlu0 %775
        %vm777 = vcmask 15360
        %v778 = vsel %vm777, %v774, %v776
        %v782 = vmul.f32 %v713, %v774
        %v783 = vmul.f32 %v715, %v778
        %v784 = vmul.f32 %v756, %v776
        %v785 = vmul.f32 %v717, %v774
        %v786 = vmul.f32 %v719, %v778
        %v787 = vmul.f32 %v759, %v776
        %794 = vrot.lane.b32.xlu0 %v782, 126
        %v795 = vpop.permute.xlu0 %794
        %796 = vrot.lane.b32.xlu0 %v783, 126
        %v797 = vpop.permute.xlu0 %796
        %798 = vrot.lane.b32.xlu0 %v784, 126
        %v799 = vpop.permute.xlu0 %798
        %800 = vrot.lane.b32.xlu0 %v785, 126
        %v801 = vpop.permute.xlu0 %800
        %802 = vrot.lane.b32.xlu0 %v786, 126
        %v803 = vpop.permute.xlu0 %802
        %804 = vrot.lane.b32.xlu0 %v787, 126
        %v805 = vpop.permute.xlu0 %804
        %vm806 = vcmask 1031168
        %v807 = vsel %vm806, %v795, %v797
        %v808 = vsel %vm806, %v797, %v799
        %v809 = vsel %vm806, %v801, %v803
        %v810 = vsel %vm806, %v803, %v805
        %v815 = vadd.f32 %v663, %v807
        %v816 = vadd.f32 %v664, %v808
        %v817 = vadd.f32 %v665, %v809
        %v818 = vadd.f32 %v666, %v810
        %s819 = scalar_lea.vmem %s2, 24
        %v820 = vld [vmem:[%s819] sm:$0xf]
        %v821 = vld [vmem:[%s819 + $0x4] sm:$0xf]
        %v824 = vunpack.c.l.b16 %v820
        %v825 = vunpack.c.l.b16 %v821
        %v826 = vpack.c.b16 %v825, %v824
        %v828 = vsel %vm442, %v826, 0
        %830 = vmatprep.subr.bf16.mxu0 %v439
        %831 = vmatpush1.bf16.msra.mxu0 %v438
        %832 = vmatprep.subr.bf16.mxu0 0
        %833 = vmatpush1.bf16.msra.mxu0 0
        %834 = vmatprep.subr.bf16.mxu0 0
        %835 = vmatpush1.bf16.msra.mxu0 0
        %836 = vmatprep.subr.bf16.mxu0 0
        %837 = vmatpush1.bf16.msra.mxu0 0
        %838 = vmatprep.subr.bf16.mxu0 0
        %839 = vmatpush1.bf16.msra.mxu0 0
        %840 = vmatprep.subr.bf16.mxu0 0
        %841 = vmatpush1.bf16.msra.mxu0 0
        %842 = vmatprep.subr.bf16.mxu0 0
        %843 = vmatpush1.bf16.msra.mxu0 0
        %844 = vmatprep.subr.bf16.mxu0 0
        %845 = vmatpush1.bf16.msra.mxu0 0
        %846 = vmatprep.subr.bf16.mxu0 0
        %847 = vmatpush1.bf16.msra.mxu0 0
        %848 = vmatprep.subr.bf16.mxu0 0
        %849 = vmatpush1.bf16.msra.mxu0 0
        %850 = vmatprep.subr.bf16.mxu0 0
        %851 = vmatpush1.bf16.msra.mxu0 0
        %852 = vmatprep.subr.bf16.mxu0 0
        %853 = vmatpush1.bf16.msra.mxu0 0
        %854 = vmatprep.subr.bf16.mxu0 0
        %855 = vmatpush1.bf16.msra.mxu0 0
        %856 = vmatprep.subr.bf16.mxu0 0
        %857 = vmatpush1.bf16.msra.mxu0 0
        %858 = vmatprep.subr.bf16.mxu0 0
        %859 = vmatpush1.bf16.msra.mxu0 0
        %860 = vmatprep.subr.bf16.mxu0 0
        %861 = vmatpush1.bf16.msra.mxu0 0
        %862 = vmatprep.mubr.bf16.mxu0 0
        %863 = vmatmul.mubr.bf16.gmra.mrb[0].mxu0 %v828
        %v864 = vpop.f32.mrb[0].mxu0
        %v865 = vadd.f32 0.0, %v864
        %v866 = vpop.f32.mrb[0].mxu0
        %v867 = vadd.f32 0.0, %v866
        %v868 = vpop.f32.mrb[0].mxu0
        %v869 = vadd.f32 0.0, %v868
        %v870 = vpop.f32.mrb[0].mxu0
        %v871 = vadd.f32 0.0, %v870
        %872 = vdwg.mxu0
        %873 = vmatprep.subr.bf16.mxu0 0
        %874 = vmatpush1.bf16.msra.mxu0 %v521
        %875 = vmatprep.subr.bf16.mxu0 0
        %876 = vmatpush1.bf16.msra.mxu0 0
        %877 = vmatprep.subr.bf16.mxu0 0
        %878 = vmatpush1.bf16.msra.mxu0 0
        %879 = vmatprep.subr.bf16.mxu0 0
        %880 = vmatpush1.bf16.msra.mxu0 0
        %881 = vmatprep.subr.bf16.mxu0 0
        %882 = vmatpush1.bf16.msra.mxu0 0
        %883 = vmatprep.subr.bf16.mxu0 0
        %884 = vmatpush1.bf16.msra.mxu0 0
        %885 = vmatprep.subr.bf16.mxu0 0
        %886 = vmatpush1.bf16.msra.mxu0 0
        %887 = vmatprep.subr.bf16.mxu0 0
        %888 = vmatpush1.bf16.msra.mxu0 0
        %889 = vmatprep.subr.bf16.mxu0 0
        %890 = vmatpush1.bf16.msra.mxu0 0
        %891 = vmatprep.subr.bf16.mxu0 0
        %892 = vmatpush1.bf16.msra.mxu0 0
        %893 = vmatprep.subr.bf16.mxu0 0
        %894 = vmatpush1.bf16.msra.mxu0 0
        %895 = vmatprep.subr.bf16.mxu0 0
        %896 = vmatpush1.bf16.msra.mxu0 0
        %897 = vmatprep.subr.bf16.mxu0 0
        %898 = vmatpush1.bf16.msra.mxu0 0
        %899 = vmatprep.subr.bf16.mxu0 0
        %900 = vmatpush1.bf16.msra.mxu0 0
        %901 = vmatprep.subr.bf16.mxu0 0
        %902 = vmatpush1.bf16.msra.mxu0 0
        %903 = vmatprep.subr.bf16.mxu0 0
        %904 = vmatpush1.bf16.msra.mxu0 0
        %905 = vmatprep.mubr.bf16.mxu0 0
        %906 = vmatmul.mubr.bf16.gmra.mrb[0].mxu0 %v828
        %v907 = vpop.f32.mrb[0].mxu0
        %v908 = vadd.f32 0.0, %v907
        %v909 = vpop.f32.mrb[0].mxu0
        %v910 = vpop.f32.mrb[0].mxu0
        %v911 = vadd.f32 0.0, %v910
        %v912 = vpop.f32.mrb[0].mxu0
        %913 = vdwg.mxu0
        %s914 = scalar_lea.vmem [#allocation5], 6
        %v915 = vld [vmem:[%s914] sm:$0x3]
        %v917 = vlaneseq
        %v918 = vshrl.u32 %v917, 7
        %v919 = vsub.s32 0, %v918
        %v920 = vrot.slane %v915, %v919
        %v921 = vlaneseq
        %v922 = vshrl.u32 %v921, 7
        %v923 = vsub.s32 1, %v922
        %v924 = vrot.slane %v915, %v923
        %925 = vrot.lane.b32.xlu0 %v920, 16
        %v926 = vpop.permute.xlu0 %925
        %927 = vrot.lane.b32.xlu0 %v924, 16
        %v928 = vpop.permute.xlu0 %927
        %v929 = vsel %vm442, %v926, %v928
        %v933 = vmul.f32 %v865, %v926
        %v934 = vmul.f32 %v867, %v929
        %v935 = vmul.f32 %v908, %v928
        %v936 = vmul.f32 %v869, %v926
        %v937 = vmul.f32 %v871, %v929
        %v938 = vmul.f32 %v911, %v928
        %945 = vrot.lane.b32.xlu0 %v933, 112
        %v946 = vpop.permute.xlu0 %945
        %947 = vrot.lane.b32.xlu0 %v934, 112
        %v948 = vpop.permute.xlu0 %947
        %949 = vrot.lane.b32.xlu0 %v935, 112
        %v950 = vpop.permute.xlu0 %949
        %951 = vrot.lane.b32.xlu0 %v936, 112
        %v952 = vpop.permute.xlu0 %951
        %953 = vrot.lane.b32.xlu0 %v937, 112
        %v954 = vpop.permute.xlu0 %953
        %955 = vrot.lane.b32.xlu0 %v938, 112
        %v956 = vpop.permute.xlu0 %955
        %vm957 = vcmask 916480
        %v958 = vsel %vm957, %v946, %v948
        %v959 = vsel %vm957, %v948, %v950
        %v960 = vsel %vm957, %v952, %v954
        %v961 = vsel %vm957, %v954, %v956
        %v966 = vadd.f32 %v815, %v958
        %v967 = vadd.f32 %v816, %v959
        %v968 = vadd.f32 %v817, %v960
        %v969 = vadd.f32 %v818, %v961
        %s970 = scalar_lea.vmem %s2, 32
        %v971 = vld [vmem:[%s970] sm:$0xf]
        %v972 = vld [vmem:[%s970 + $0x4] sm:$0xf]
        %v975 = vunpack.c.l.b16 %v971
        %v976 = vunpack.c.l.b16 %v972
        %v977 = vpack.c.b16 %v976, %v975
        %v979 = vsel %vm442, %v977, 0
        %981 = vmatprep.subr.bf16.mxu0 %v439
        %982 = vmatpush1.bf16.msra.mxu0 %v438
        %983 = vmatprep.subr.bf16.mxu0 0
        %984 = vmatpush1.bf16.msra.mxu0 0
        %985 = vmatprep.subr.bf16.mxu0 0
        %986 = vmatpush1.bf16.msra.mxu0 0
        %987 = vmatprep.subr.bf16.mxu0 0
        %988 = vmatpush1.bf16.msra.mxu0 0
        %989 = vmatprep.subr.bf16.mxu0 0
        %990 = vmatpush1.bf16.msra.mxu0 0
        %991 = vmatprep.subr.bf16.mxu0 0
        %992 = vmatpush1.bf16.msra.mxu0 0
        %993 = vmatprep.subr.bf16.mxu0 0
        %994 = vmatpush1.bf16.msra.mxu0 0
        %995 = vmatprep.subr.bf16.mxu0 0
        %996 = vmatpush1.bf16.msra.mxu0 0
        %997 = vmatprep.subr.bf16.mxu0 0
        %998 = vmatpush1.bf16.msra.mxu0 0
        %999 = vmatprep.subr.bf16.mxu0 0
        %1000 = vmatpush1.bf16.msra.mxu0 0
        %1001 = vmatprep.subr.bf16.mxu0 0
        %1002 = vmatpush1.bf16.msra.mxu0 0
        %1003 = vmatprep.subr.bf16.mxu0 0
        %1004 = vmatpush1.bf16.msra.mxu0 0
        %1005 = vmatprep.subr.bf16.mxu0 0
        %1006 = vmatpush1.bf16.msra.mxu0 0
        %1007 = vmatprep.subr.bf16.mxu0 0
        %1008 = vmatpush1.bf16.msra.mxu0 0
        %1009 = vmatprep.subr.bf16.mxu0 0
        %1010 = vmatpush1.bf16.msra.mxu0 0
        %1011 = vmatprep.subr.bf16.mxu0 0
        %1012 = vmatpush1.bf16.msra.mxu0 0
        %1013 = vmatprep.mubr.bf16.mxu0 0
        %1014 = vmatmul.mubr.bf16.gmra.mrb[0].mxu0 %v979
        %v1015 = vpop.f32.mrb[0].mxu0
        %v1016 = vadd.f32 0.0, %v1015
        %v1017 = vpop.f32.mrb[0].mxu0
        %v1018 = vadd.f32 0.0, %v1017
        %v1019 = vpop.f32.mrb[0].mxu0
        %v1020 = vadd.f32 0.0, %v1019
        %v1021 = vpop.f32.mrb[0].mxu0
        %v1022 = vadd.f32 0.0, %v1021
        %1023 = vdwg.mxu0
        %1024 = vmatprep.subr.bf16.mxu0 0
        %1025 = vmatpush1.bf16.msra.mxu0 %v521
        %1026 = vmatprep.subr.bf16.mxu0 0
        %1027 = vmatpush1.bf16.msra.mxu0 0
        %1028 = vmatprep.subr.bf16.mxu0 0
        %1029 = vmatpush1.bf16.msra.mxu0 0
        %1030 = vmatprep.subr.bf16.mxu0 0
        %1031 = vmatpush1.bf16.msra.mxu0 0
        %1032 = vmatprep.subr.bf16.mxu0 0
        %1033 = vmatpush1.bf16.msra.mxu0 0
        %1034 = vmatprep.subr.bf16.mxu0 0
        %1035 = vmatpush1.bf16.msra.mxu0 0
        %1036 = vmatprep.subr.bf16.mxu0 0
        %1037 = vmatpush1.bf16.msra.mxu0 0
        %1038 = vmatprep.subr.bf16.mxu0 0
        %1039 = vmatpush1.bf16.msra.mxu0 0
        %1040 = vmatprep.subr.bf16.mxu0 0
        %1041 = vmatpush1.bf16.msra.mxu0 0
        %1042 = vmatprep.subr.bf16.mxu0 0
        %1043 = vmatpush1.bf16.msra.mxu0 0
        %1044 = vmatprep.subr.bf16.mxu0 0
        %1045 = vmatpush1.bf16.msra.mxu0 0
        %1046 = vmatprep.subr.bf16.mxu0 0
        %1047 = vmatpush1.bf16.msra.mxu0 0
        %1048 = vmatprep.subr.bf16.mxu0 0
        %1049 = vmatpush1.bf16.msra.mxu0 0
        %1050 = vmatprep.subr.bf16.mxu0 0
        %1051 = vmatpush1.bf16.msra.mxu0 0
        %1052 = vmatprep.subr.bf16.mxu0 0
        %1053 = vmatpush1.bf16.msra.mxu0 0
        %1054 = vmatprep.subr.bf16.mxu0 0
        %1055 = vmatpush1.bf16.msra.mxu0 0
        %1056 = vmatprep.mubr.bf16.mxu0 0
        %1057 = vmatmul.mubr.bf16.gmra.mrb[0].mxu0 %v979
        %v1058 = vpop.f32.mrb[0].mxu0
        %v1059 = vadd.f32 0.0, %v1058
        %v1060 = vpop.f32.mrb[0].mxu0
        %v1061 = vpop.f32.mrb[0].mxu0
        %v1062 = vadd.f32 0.0, %v1061
        %v1063 = vpop.f32.mrb[0].mxu0
        %1064 = vdwg.mxu0
        %s1065 = scalar_lea.vmem [#allocation5], 8
        %v1066 = vld [vmem:[%s1065] sm:$0x3]
        %v1068 = vlaneseq
        %v1069 = vshrl.u32 %v1068, 7
        %v1070 = vsub.s32 0, %v1069
        %v1071 = vrot.slane %v1066, %v1070
        %v1072 = vlaneseq
        %v1073 = vshrl.u32 %v1072, 7
        %v1074 = vsub.s32 1, %v1073
        %v1075 = vrot.slane %v1066, %v1074
        %1076 = vrot.lane.b32.xlu0 %v1071, 17
        %v1077 = vpop.permute.xlu0 %1076
        %1078 = vrot.lane.b32.xlu0 %v1075, 17
        %v1079 = vpop.permute.xlu0 %1078
        %vm1080 = vcmask 138240
        %v1081 = vsel %vm1080, %v1077, %v1079
        %v1085 = vmul.f32 %v1016, %v1077
        %v1086 = vmul.f32 %v1018, %v1081
        %v1087 = vmul.f32 %v1059, %v1079
        %v1088 = vmul.f32 %v1020, %v1077
        %v1089 = vmul.f32 %v1022, %v1081
        %v1090 = vmul.f32 %v1062, %v1079
        %1097 = vrot.lane.b32.xlu0 %v1085, 111
        %v1098 = vpop.permute.xlu0 %1097
        %1099 = vrot.lane.b32.xlu0 %v1086, 111
        %v1100 = vpop.permute.xlu0 %1099
        %1101 = vrot.lane.b32.xlu0 %v1087, 111
        %v1102 = vpop.permute.xlu0 %1101
        %1103 = vrot.lane.b32.xlu0 %v1088, 111
        %v1104 = vpop.permute.xlu0 %1103
        %1105 = vrot.lane.b32.xlu0 %v1089, 111
        %v1106 = vpop.permute.xlu0 %1105
        %1107 = vrot.lane.b32.xlu0 %v1090, 111
        %v1108 = vpop.permute.xlu0 %1107
        %vm1109 = vcmask 908288
        %v1110 = vsel %vm1109, %v1098, %v1100
        %v1111 = vsel %vm1109, %v1100, %v1102
        %v1112 = vsel %vm1109, %v1104, %v1106
        %v1113 = vsel %vm1109, %v1106, %v1108
        %v1118 = vadd.f32 %v966, %v1110
        %v1119 = vadd.f32 %v967, %v1111
        %v1120 = vadd.f32 %v968, %v1112
        %v1121 = vadd.f32 %v969, %v1113
        %s1122 = scalar_lea.vmem %s2, 40
        %v1123 = vld [vmem:[%s1122] sm:$0xf]
        %v1124 = vld [vmem:[%s1122 + $0x4] sm:$0xf]
        %v1127 = vunpack.c.l.b16 %v1123
        %v1128 = vunpack.c.l.b16 %v1124
        %v1129 = vpack.c.b16 %v1128, %v1127
        %v1131 = vsel %vm442, %v1129, 0
        %1133 = vmatprep.subr.bf16.mxu0 %v439
        %1134 = vmatpush1.bf16.msra.mxu0 %v438
        %1135 = vmatprep.subr.bf16.mxu0 0
        %1136 = vmatpush1.bf16.msra.mxu0 0
        %1137 = vmatprep.subr.bf16.mxu0 0
        %1138 = vmatpush1.bf16.msra.mxu0 0
        %1139 = vmatprep.subr.bf16.mxu0 0
        %1140 = vmatpush1.bf16.msra.mxu0 0
        %1141 = vmatprep.subr.bf16.mxu0 0
        %1142 = vmatpush1.bf16.msra.mxu0 0
        %1143 = vmatprep.subr.bf16.mxu0 0
        %1144 = vmatpush1.bf16.msra.mxu0 0
        %1145 = vmatprep.subr.bf16.mxu0 0
        %1146 = vmatpush1.bf16.msra.mxu0 0
        %1147 = vmatprep.subr.bf16.mxu0 0
        %1148 = vmatpush1.bf16.msra.mxu0 0
        %1149 = vmatprep.subr.bf16.mxu0 0
        %1150 = vmatpush1.bf16.msra.mxu0 0
        %1151 = vmatprep.subr.bf16.mxu0 0
        %1152 = vmatpush1.bf16.msra.mxu0 0
        %1153 = vmatprep.subr.bf16.mxu0 0
        %1154 = vmatpush1.bf16.msra.mxu0 0
        %1155 = vmatprep.subr.bf16.mxu0 0
        %1156 = vmatpush1.bf16.msra.mxu0 0
        %1157 = vmatprep.subr.bf16.mxu0 0
        %1158 = vmatpush1.bf16.msra.mxu0 0
        %1159 = vmatprep.subr.bf16.mxu0 0
        %1160 = vmatpush1.bf16.msra.mxu0 0
        %1161 = vmatprep.subr.bf16.mxu0 0
        %1162 = vmatpush1.bf16.msra.mxu0 0
        %1163 = vmatprep.subr.bf16.mxu0 0
        %1164 = vmatpush1.bf16.msra.mxu0 0
        %1165 = vmatprep.mubr.bf16.mxu0 0
        %1166 = vmatmul.mubr.bf16.gmra.mrb[0].mxu0 %v1131
        %v1167 = vpop.f32.mrb[0].mxu0
        %v1168 = vadd.f32 0.0, %v1167
        %v1169 = vpop.f32.mrb[0].mxu0
        %v1170 = vadd.f32 0.0, %v1169
        %v1171 = vpop.f32.mrb[0].mxu0
        %v1172 = vadd.f32 0.0, %v1171
        %v1173 = vpop.f32.mrb[0].mxu0
        %v1174 = vadd.f32 0.0, %v1173
        %1175 = vdwg.mxu0
        %1176 = vmatprep.subr.bf16.mxu0 0
        %1177 = vmatpush1.bf16.msra.mxu0 %v521
        %1178 = vmatprep.subr.bf16.mxu0 0
        %1179 = vmatpush1.bf16.msra.mxu0 0
        %1180 = vmatprep.subr.bf16.mxu0 0
        %1181 = vmatpush1.bf16.msra.mxu0 0
        %1182 = vmatprep.subr.bf16.mxu0 0
        %1183 = vmatpush1.bf16.msra.mxu0 0
        %1184 = vmatprep.subr.bf16.mxu0 0
        %1185 = vmatpush1.bf16.msra.mxu0 0
        %1186 = vmatprep.subr.bf16.mxu0 0
        %1187 = vmatpush1.bf16.msra.mxu0 0
        %1188 = vmatprep.subr.bf16.mxu0 0
        %1189 = vmatpush1.bf16.msra.mxu0 0
        %1190 = vmatprep.subr.bf16.mxu0 0
        %1191 = vmatpush1.bf16.msra.mxu0 0
        %1192 = vmatprep.subr.bf16.mxu0 0
        %1193 = vmatpush1.bf16.msra.mxu0 0
        %1194 = vmatprep.subr.bf16.mxu0 0
        %1195 = vmatpush1.bf16.msra.mxu0 0
        %1196 = vmatprep.subr.bf16.mxu0 0
        %1197 = vmatpush1.bf16.msra.mxu0 0
        %1198 = vmatprep.subr.bf16.mxu0 0
        %1199 = vmatpush1.bf16.msra.mxu0 0
        %1200 = vmatprep.subr.bf16.mxu0 0
        %1201 = vmatpush1.bf16.msra.mxu0 0
        %1202 = vmatprep.subr.bf16.mxu0 0
        %1203 = vmatpush1.bf16.msra.mxu0 0
        %1204 = vmatprep.subr.bf16.mxu0 0
        %1205 = vmatpush1.bf16.msra.mxu0 0
        %1206 = vmatprep.subr.bf16.mxu0 0
        %1207 = vmatpush1.bf16.msra.mxu0 0
        %1208 = vmatprep.mubr.bf16.mxu0 0
        %1209 = vmatmul.mubr.bf16.gmra.mrb[0].mxu0 %v1131
        %v1210 = vpop.f32.mrb[0].mxu0
        %v1211 = vadd.f32 0.0, %v1210
        %v1212 = vpop.f32.mrb[0].mxu0
        %v1213 = vpop.f32.mrb[0].mxu0
        %v1214 = vadd.f32 0.0, %v1213
        %v1215 = vpop.f32.mrb[0].mxu0
        %1216 = vdwg.mxu0
        %s1217 = scalar_lea.vmem [#allocation5], 10
        %v1218 = vld [vmem:[%s1217] sm:$0x3]
        %v1220 = vlaneseq
        %v1221 = vshrl.u32 %v1220, 7
        %v1222 = vsub.s32 0, %v1221
        %v1223 = vrot.slane %v1218, %v1222
        %v1224 = vlaneseq
        %v1225 = vshrl.u32 %v1224, 7
        %v1226 = vsub.s32 1, %v1225
        %v1227 = vrot.slane %v1218, %v1226
        %1228 = vrot.lane.b32.xlu0 %v1223, 18
        %v1229 = vpop.permute.xlu0 %1228
        %1230 = vrot.lane.b32.xlu0 %v1227, 18
        %v1231 = vpop.permute.xlu0 %1230
        %vm1232 = vcmask 146432
        %v1233 = vsel %vm1232, %v1229, %v1231
        %v1237 = vmul.f32 %v1168, %v1229
        %v1238 = vmul.f32 %v1170, %v1233
        %v1239 = vmul.f32 %v1211, %v1231
        %v1240 = vmul.f32 %v1172, %v1229
        %v1241 = vmul.f32 %v1174, %v1233
        %v1242 = vmul.f32 %v1214, %v1231
        %1249 = vrot.lane.b32.xlu0 %v1237, 110
        %v1250 = vpop.permute.xlu0 %1249
        %1251 = vrot.lane.b32.xlu0 %v1238, 110
        %v1252 = vpop.permute.xlu0 %1251
        %1253 = vrot.lane.b32.xlu0 %v1239, 110
        %v1254 = vpop.permute.xlu0 %1253
        %1255 = vrot.lane.b32.xlu0 %v1240, 110
        %v1256 = vpop.permute.xlu0 %1255
        %1257 = vrot.lane.b32.xlu0 %v1241, 110
        %v1258 = vpop.permute.xlu0 %1257
        %1259 = vrot.lane.b32.xlu0 %v1242, 110
        %v1260 = vpop.permute.xlu0 %1259
        %vm1261 = vcmask 900096
        %v1262 = vsel %vm1261, %v1250, %v1252
        %v1263 = vsel %vm1261, %v1252, %v1254
        %v1264 = vsel %vm1261, %v1256, %v1258
        %v1265 = vsel %vm1261, %v1258, %v1260
        %v1270 = vadd.f32 %v1118, %v1262
        %v1271 = vadd.f32 %v1119, %v1263
        %v1272 = vadd.f32 %v1120, %v1264
        %v1273 = vadd.f32 %v1121, %v1265
        %s1274 = scalar_lea.vmem %s2, 48
        %v1275 = vld [vmem:[%s1274] sm:$0xf]
        %v1276 = vld [vmem:[%s1274 + $0x4] sm:$0xf]
        %v1279 = vunpack.c.l.b16 %v1275
        %v1280 = vunpack.c.l.b16 %v1276
        %v1281 = vpack.c.b16 %v1280, %v1279
        %v1283 = vsel %vm442, %v1281, 0
        %1285 = vmatprep.subr.bf16.mxu0 %v439
        %1286 = vmatpush1.bf16.msra.mxu0 %v438
        %1287 = vmatprep.subr.bf16.mxu0 0
        %1288 = vmatpush1.bf16.msra.mxu0 0
        %1289 = vmatprep.subr.bf16.mxu0 0
        %1290 = vmatpush1.bf16.msra.mxu0 0
        %1291 = vmatprep.subr.bf16.mxu0 0
        %1292 = vmatpush1.bf16.msra.mxu0 0
        %1293 = vmatprep.subr.bf16.mxu0 0
        %1294 = vmatpush1.bf16.msra.mxu0 0
        %1295 = vmatprep.subr.bf16.mxu0 0
        %1296 = vmatpush1.bf16.msra.mxu0 0
        %1297 = vmatprep.subr.bf16.mxu0 0
        %1298 = vmatpush1.bf16.msra.mxu0 0
        %1299 = vmatprep.subr.bf16.mxu0 0
        %1300 = vmatpush1.bf16.msra.mxu0 0
        %1301 = vmatprep.subr.bf16.mxu0 0
        %1302 = vmatpush1.bf16.msra.mxu0 0
        %1303 = vmatprep.subr.bf16.mxu0 0
        %1304 = vmatpush1.bf16.msra.mxu0 0
        %1305 = vmatprep.subr.bf16.mxu0 0
        %1306 = vmatpush1.bf16.msra.mxu0 0
        %1307 = vmatprep.subr.bf16.mxu0 0
        %1308 = vmatpush1.bf16.msra.mxu0 0
        %1309 = vmatprep.subr.bf16.mxu0 0
        %1310 = vmatpush1.bf16.msra.mxu0 0
        %1311 = vmatprep.subr.bf16.mxu0 0
        %1312 = vmatpush1.bf16.msra.mxu0 0
        %1313 = vmatprep.subr.bf16.mxu0 0
        %1314 = vmatpush1.bf16.msra.mxu0 0
        %1315 = vmatprep.subr.bf16.mxu0 0
        %1316 = vmatpush1.bf16.msra.mxu0 0
        %1317 = vmatprep.mubr.bf16.mxu0 0
        %1318 = vmatmul.mubr.bf16.gmra.mrb[0].mxu0 %v1283
        %v1319 = vpop.f32.mrb[0].mxu0
        %v1320 = vadd.f32 0.0, %v1319
        %v1321 = vpop.f32.mrb[0].mxu0
        %v1322 = vadd.f32 0.0, %v1321
        %v1323 = vpop.f32.mrb[0].mxu0
        %v1324 = vadd.f32 0.0, %v1323
        %v1325 = vpop.f32.mrb[0].mxu0
        %v1326 = vadd.f32 0.0, %v1325
        %1327 = vdwg.mxu0
        %1328 = vmatprep.subr.bf16.mxu0 0
        %1329 = vmatpush1.bf16.msra.mxu0 %v521
        %1330 = vmatprep.subr.bf16.mxu0 0
        %1331 = vmatpush1.bf16.msra.mxu0 0
        %1332 = vmatprep.subr.bf16.mxu0 0
        %1333 = vmatpush1.bf16.msra.mxu0 0
        %1334 = vmatprep.subr.bf16.mxu0 0
        %1335 = vmatpush1.bf16.msra.mxu0 0
        %1336 = vmatprep.subr.bf16.mxu0 0
        %1337 = vmatpush1.bf16.msra.mxu0 0
        %1338 = vmatprep.subr.bf16.mxu0 0
        %1339 = vmatpush1.bf16.msra.mxu0 0
        %1340 = vmatprep.subr.bf16.mxu0 0
        %1341 = vmatpush1.bf16.msra.mxu0 0
        %1342 = vmatprep.subr.bf16.mxu0 0
        %1343 = vmatpush1.bf16.msra.mxu0 0
        %1344 = vmatprep.subr.bf16.mxu0 0
        %1345 = vmatpush1.bf16.msra.mxu0 0
        %1346 = vmatprep.subr.bf16.mxu0 0
        %1347 = vmatpush1.bf16.msra.mxu0 0
        %1348 = vmatprep.subr.bf16.mxu0 0
        %1349 = vmatpush1.bf16.msra.mxu0 0
        %1350 = vmatprep.subr.bf16.mxu0 0
        %1351 = vmatpush1.bf16.msra.mxu0 0
        %1352 = vmatprep.subr.bf16.mxu0 0
        %1353 = vmatpush1.bf16.msra.mxu0 0
        %1354 = vmatprep.subr.bf16.mxu0 0
        %1355 = vmatpush1.bf16.msra.mxu0 0
        %1356 = vmatprep.subr.bf16.mxu0 0
        %1357 = vmatpush1.bf16.msra.mxu0 0
        %1358 = vmatprep.subr.bf16.mxu0 0
        %1359 = vmatpush1.bf16.msra.mxu0 0
        %1360 = vmatprep.mubr.bf16.mxu0 0
        %1361 = vmatmul.mubr.bf16.gmra.mrb[0].mxu0 %v1283
        %v1362 = vpop.f32.mrb[0].mxu0
        %v1363 = vadd.f32 0.0, %v1362
        %v1364 = vpop.f32.mrb[0].mxu0
        %v1365 = vpop.f32.mrb[0].mxu0
        %v1366 = vadd.f32 0.0, %v1365
        %v1367 = vpop.f32.mrb[0].mxu0
        %1368 = vdwg.mxu0
        %s1369 = scalar_lea.vmem [#allocation5], 12
        %v1370 = vld [vmem:[%s1369] sm:$0x3]
        %v1372 = vlaneseq
        %v1373 = vshrl.u32 %v1372, 7
        %v1374 = vsub.s32 0, %v1373
        %v1375 = vrot.slane %v1370, %v1374
        %v1376 = vlaneseq
        %v1377 = vshrl.u32 %v1376, 7
        %v1378 = vsub.s32 1, %v1377
        %v1379 = vrot.slane %v1370, %v1378
        %1380 = vrot.lane.b32.xlu0 %v1375, 32
        %v1381 = vpop.permute.xlu0 %1380
        %1382 = vrot.lane.b32.xlu0 %v1379, 32
        %v1383 = vpop.permute.xlu0 %1382
        %vm1384 = vcmask 261120
        %v1385 = vsel %vm1384, %v1381, %v1383
        %v1389 = vmul.f32 %v1320, %v1381
        %v1390 = vmul.f32 %v1322, %v1385
        %v1391 = vmul.f32 %v1363, %v1383
        %v1392 = vmul.f32 %v1324, %v1381
        %v1393 = vmul.f32 %v1326, %v1385
        %v1394 = vmul.f32 %v1366, %v1383
        %1401 = vrot.lane.b32.xlu0 %v1389, 96
        %v1402 = vpop.permute.xlu0 %1401
        %1403 = vrot.lane.b32.xlu0 %v1390, 96
        %v1404 = vpop.permute.xlu0 %1403
        %1405 = vrot.lane.b32.xlu0 %v1391, 96
        %v1406 = vpop.permute.xlu0 %1405
        %1407 = vrot.lane.b32.xlu0 %v1392, 96
        %v1408 = vpop.permute.xlu0 %1407
        %1409 = vrot.lane.b32.xlu0 %v1393, 96
        %v1410 = vpop.permute.xlu0 %1409
        %1411 = vrot.lane.b32.xlu0 %v1394, 96
        %v1412 = vpop.permute.xlu0 %1411
        %vm1413 = vcmask 785408
        %v1414 = vsel %vm1413, %v1402, %v1404
        %v1415 = vsel %vm1413, %v1404, %v1406
        %v1416 = vsel %vm1413, %v1408, %v1410
        %v1417 = vsel %vm1413, %v1410, %v1412
        %v1422 = vadd.f32 %v1270, %v1414
        %v1423 = vadd.f32 %v1271, %v1415
        %v1424 = vadd.f32 %v1272, %v1416
        %v1425 = vadd.f32 %v1273, %v1417
        %s1426 = scalar_lea.vmem %s2, 56
        %v1427 = vld [vmem:[%s1426] sm:$0xf]
        %v1428 = vld [vmem:[%s1426 + $0x4] sm:$0xf]
        %v1431 = vunpack.c.l.b16 %v1427
        %v1432 = vunpack.c.l.b16 %v1428
        %v1433 = vpack.c.b16 %v1432, %v1431
        %v1435 = vsel %vm442, %v1433, 0
        %1437 = vmatprep.subr.bf16.mxu0 %v439
        %1438 = vmatpush1.bf16.msra.mxu0 %v438
        %1439 = vmatprep.subr.bf16.mxu0 0
        %1440 = vmatpush1.bf16.msra.mxu0 0
        %1441 = vmatprep.subr.bf16.mxu0 0
        %1442 = vmatpush1.bf16.msra.mxu0 0
        %1443 = vmatprep.subr.bf16.mxu0 0
        %1444 = vmatpush1.bf16.msra.mxu0 0
        %1445 = vmatprep.subr.bf16.mxu0 0
        %1446 = vmatpush1.bf16.msra.mxu0 0
        %1447 = vmatprep.subr.bf16.mxu0 0
        %1448 = vmatpush1.bf16.msra.mxu0 0
        %1449 = vmatprep.subr.bf16.mxu0 0
        %1450 = vmatpush1.bf16.msra.mxu0 0
        %1451 = vmatprep.subr.bf16.mxu0 0
        %1452 = vmatpush1.bf16.msra.mxu0 0
        %1453 = vmatprep.subr.bf16.mxu0 0
        %1454 = vmatpush1.bf16.msra.mxu0 0
        %1455 = vmatprep.subr.bf16.mxu0 0
        %1456 = vmatpush1.bf16.msra.mxu0 0
        %1457 = vmatprep.subr.bf16.mxu0 0
        %1458 = vmatpush1.bf16.msra.mxu0 0
        %1459 = vmatprep.subr.bf16.mxu0 0
        %1460 = vmatpush1.bf16.msra.mxu0 0
        %1461 = vmatprep.subr.bf16.mxu0 0
        %1462 = vmatpush1.bf16.msra.mxu0 0
        %1463 = vmatprep.subr.bf16.mxu0 0
        %1464 = vmatpush1.bf16.msra.mxu0 0
        %1465 = vmatprep.subr.bf16.mxu0 0
        %1466 = vmatpush1.bf16.msra.mxu0 0
        %1467 = vmatprep.subr.bf16.mxu0 0
        %1468 = vmatpush1.bf16.msra.mxu0 0
        %1469 = vmatprep.mubr.bf16.mxu0 0
        %1470 = vmatmul.mubr.bf16.gmra.mrb[0].mxu0 %v1435
        %v1471 = vpop.f32.mrb[0].mxu0
        %v1472 = vadd.f32 0.0, %v1471
        %v1473 = vpop.f32.mrb[0].mxu0
        %v1474 = vadd.f32 0.0, %v1473
        %v1475 = vpop.f32.mrb[0].mxu0
        %v1476 = vadd.f32 0.0, %v1475
        %v1477 = vpop.f32.mrb[0].mxu0
        %v1478 = vadd.f32 0.0, %v1477
        %1479 = vdwg.mxu0
        %1480 = vmatprep.subr.bf16.mxu0 0
        %1481 = vmatpush1.bf16.msra.mxu0 %v521
        %1482 = vmatprep.subr.bf16.mxu0 0
        %1483 = vmatpush1.bf16.msra.mxu0 0
        %1484 = vmatprep.subr.bf16.mxu0 0
        %1485 = vmatpush1.bf16.msra.mxu0 0
        %1486 = vmatprep.subr.bf16.mxu0 0
        %1487 = vmatpush1.bf16.msra.mxu0 0
        %1488 = vmatprep.subr.bf16.mxu0 0
        %1489 = vmatpush1.bf16.msra.mxu0 0
        %1490 = vmatprep.subr.bf16.mxu0 0
        %1491 = vmatpush1.bf16.msra.mxu0 0
        %1492 = vmatprep.subr.bf16.mxu0 0
        %1493 = vmatpush1.bf16.msra.mxu0 0
        %1494 = vmatprep.subr.bf16.mxu0 0
        %1495 = vmatpush1.bf16.msra.mxu0 0
        %1496 = vmatprep.subr.bf16.mxu0 0
        %1497 = vmatpush1.bf16.msra.mxu0 0
        %1498 = vmatprep.subr.bf16.mxu0 0
        %1499 = vmatpush1.bf16.msra.mxu0 0
        %1500 = vmatprep.subr.bf16.mxu0 0
        %1501 = vmatpush1.bf16.msra.mxu0 0
        %1502 = vmatprep.subr.bf16.mxu0 0
        %1503 = vmatpush1.bf16.msra.mxu0 0
        %1504 = vmatprep.subr.bf16.mxu0 0
        %1505 = vmatpush1.bf16.msra.mxu0 0
        %1506 = vmatprep.subr.bf16.mxu0 0
        %1507 = vmatpush1.bf16.msra.mxu0 0
        %1508 = vmatprep.subr.bf16.mxu0 0
        %1509 = vmatpush1.bf16.msra.mxu0 0
        %1510 = vmatprep.subr.bf16.mxu0 0
        %1511 = vmatpush1.bf16.msra.mxu0 0
        %1512 = vmatprep.mubr.bf16.mxu0 0
        %1513 = vmatmul.mubr.bf16.gmra.mrb[0].mxu0 %v1435
        %v1514 = vpop.f32.mrb[0].mxu0
        %v1515 = vadd.f32 0.0, %v1514
        %v1516 = vpop.f32.mrb[0].mxu0
        %v1517 = vpop.f32.mrb[0].mxu0
        %v1518 = vadd.f32 0.0, %v1517
        %v1519 = vpop.f32.mrb[0].mxu0
        %1520 = vdwg.mxu0
        %s1521 = scalar_lea.vmem [#allocation5], 14
        %v1522 = vld [vmem:[%s1521] sm:$0x3]
        %v1524 = vlaneseq
        %v1525 = vshrl.u32 %v1524, 7
        %v1526 = vsub.s32 0, %v1525
        %v1527 = vrot.slane %v1522, %v1526
        %v1528 = vlaneseq
        %v1529 = vshrl.u32 %v1528, 7
        %v1530 = vsub.s32 1, %v1529
        %v1531 = vrot.slane %v1522, %v1530
        %1532 = vrot.lane.b32.xlu0 %v1527, 33
        %v1533 = vpop.permute.xlu0 %1532
        %1534 = vrot.lane.b32.xlu0 %v1531, 33
        %v1535 = vpop.permute.xlu0 %1534
        %vm1536 = vcmask 269312
        %v1537 = vsel %vm1536, %v1533, %v1535
        %v1541 = vmul.f32 %v1472, %v1533
        %v1542 = vmul.f32 %v1474, %v1537
        %v1543 = vmul.f32 %v1515, %v1535
        %v1544 = vmul.f32 %v1476, %v1533
        %v1545 = vmul.f32 %v1478, %v1537
        %v1546 = vmul.f32 %v1518, %v1535
        %1553 = vrot.lane.b32.xlu0 %v1541, 95
        %v1554 = vpop.permute.xlu0 %1553
        %1555 = vrot.lane.b32.xlu0 %v1542, 95
        %v1556 = vpop.permute.xlu0 %1555
        %1557 = vrot.lane.b32.xlu0 %v1543, 95
        %v1558 = vpop.permute.xlu0 %1557
        %1559 = vrot.lane.b32.xlu0 %v1544, 95
        %v1560 = vpop.permute.xlu0 %1559
        %1561 = vrot.lane.b32.xlu0 %v1545, 95
        %v1562 = vpop.permute.xlu0 %1561
        %1563 = vrot.lane.b32.xlu0 %v1546, 95
        %v1564 = vpop.permute.xlu0 %1563
        %vm1565 = vcmask 777216
        %v1566 = vsel %vm1565, %v1554, %v1556
        %v1567 = vsel %vm1565, %v1556, %v1558
        %v1568 = vsel %vm1565, %v1560, %v1562
        %v1569 = vsel %vm1565, %v1562, %v1564
        %v1574 = vadd.f32 %v1422, %v1566
        %v1575 = vadd.f32 %v1423, %v1567
        %v1576 = vadd.f32 %v1424, %v1568
        %v1577 = vadd.f32 %v1425, %v1569
        %s1578 = scalar_lea.vmem %s2, 64
        %v1579 = vld [vmem:[%s1578] sm:$0xf]
        %v1580 = vld [vmem:[%s1578 + $0x4] sm:$0xf]
        %v1583 = vunpack.c.l.b16 %v1579
        %v1584 = vunpack.c.l.b16 %v1580
        %v1585 = vpack.c.b16 %v1584, %v1583
        %v1587 = vsel %vm442, %v1585, 0
        %1589 = vmatprep.subr.bf16.mxu0 %v439
        %1590 = vmatpush1.bf16.msra.mxu0 %v438
        %1591 = vmatprep.subr.bf16.mxu0 0
        %1592 = vmatpush1.bf16.msra.mxu0 0
        %1593 = vmatprep.subr.bf16.mxu0 0
        %1594 = vmatpush1.bf16.msra.mxu0 0
        %1595 = vmatprep.subr.bf16.mxu0 0
        %1596 = vmatpush1.bf16.msra.mxu0 0
        %1597 = vmatprep.subr.bf16.mxu0 0
        %1598 = vmatpush1.bf16.msra.mxu0 0
        %1599 = vmatprep.subr.bf16.mxu0 0
        %1600 = vmatpush1.bf16.msra.mxu0 0
        %1601 = vmatprep.subr.bf16.mxu0 0
        %1602 = vmatpush1.bf16.msra.mxu0 0
        %1603 = vmatprep.subr.bf16.mxu0 0
        %1604 = vmatpush1.bf16.msra.mxu0 0
        %1605 = vmatprep.subr.bf16.mxu0 0
        %1606 = vmatpush1.bf16.msra.mxu0 0
        %1607 = vmatprep.subr.bf16.mxu0 0
        %1608 = vmatpush1.bf16.msra.mxu0 0
        %1609 = vmatprep.subr.bf16.mxu0 0
        %1610 = vmatpush1.bf16.msra.mxu0 0
        %1611 = vmatprep.subr.bf16.mxu0 0
        %1612 = vmatpush1.bf16.msra.mxu0 0
        %1613 = vmatprep.subr.bf16.mxu0 0
        %1614 = vmatpush1.bf16.msra.mxu0 0
        %1615 = vmatprep.subr.bf16.mxu0 0
        %1616 = vmatpush1.bf16.msra.mxu0 0
        %1617 = vmatprep.subr.bf16.mxu0 0
        %1618 = vmatpush1.bf16.msra.mxu0 0
        %1619 = vmatprep.subr.bf16.mxu0 0
        %1620 = vmatpush1.bf16.msra.mxu0 0
        %1621 = vmatprep.mubr.bf16.mxu0 0
        %1622 = vmatmul.mubr.bf16.gmra.mrb[0].mxu0 %v1587
        %v1623 = vpop.f32.mrb[0].mxu0
        %v1624 = vadd.f32 0.0, %v1623
        %v1625 = vpop.f32.mrb[0].mxu0
        %v1626 = vadd.f32 0.0, %v1625
        %v1627 = vpop.f32.mrb[0].mxu0
        %v1628 = vadd.f32 0.0, %v1627
        %v1629 = vpop.f32.mrb[0].mxu0
        %v1630 = vadd.f32 0.0, %v1629
        %1631 = vdwg.mxu0
        %1632 = vmatprep.subr.bf16.mxu0 0
        %1633 = vmatpush1.bf16.msra.mxu0 %v521
        %1634 = vmatprep.subr.bf16.mxu0 0
        %1635 = vmatpush1.bf16.msra.mxu0 0
        %1636 = vmatprep.subr.bf16.mxu0 0
        %1637 = vmatpush1.bf16.msra.mxu0 0
        %1638 = vmatprep.subr.bf16.mxu0 0
        %1639 = vmatpush1.bf16.msra.mxu0 0
        %1640 = vmatprep.subr.bf16.mxu0 0
        %1641 = vmatpush1.bf16.msra.mxu0 0
        %1642 = vmatprep.subr.bf16.mxu0 0
        %1643 = vmatpush1.bf16.msra.mxu0 0
        %1644 = vmatprep.subr.bf16.mxu0 0
        %1645 = vmatpush1.bf16.msra.mxu0 0
        %1646 = vmatprep.subr.bf16.mxu0 0
        %1647 = vmatpush1.bf16.msra.mxu0 0
        %1648 = vmatprep.subr.bf16.mxu0 0
        %1649 = vmatpush1.bf16.msra.mxu0 0
        %1650 = vmatprep.subr.bf16.mxu0 0
        %1651 = vmatpush1.bf16.msra.mxu0 0
        %1652 = vmatprep.subr.bf16.mxu0 0
        %1653 = vmatpush1.bf16.msra.mxu0 0
        %1654 = vmatprep.subr.bf16.mxu0 0
        %1655 = vmatpush1.bf16.msra.mxu0 0
        %1656 = vmatprep.subr.bf16.mxu0 0
        %1657 = vmatpush1.bf16.msra.mxu0 0
        %1658 = vmatprep.subr.bf16.mxu0 0
        %1659 = vmatpush1.bf16.msra.mxu0 0
        %1660 = vmatprep.subr.bf16.mxu0 0
        %1661 = vmatpush1.bf16.msra.mxu0 0
        %1662 = vmatprep.subr.bf16.mxu0 0
        %1663 = vmatpush1.bf16.msra.mxu0 0
        %1664 = vmatprep.mubr.bf16.mxu0 0
        %1665 = vmatmul.mubr.bf16.gmra.mrb[0].mxu0 %v1587
        %v1666 = vpop.f32.mrb[0].mxu0
        %v1667 = vadd.f32 0.0, %v1666
        %v1668 = vpop.f32.mrb[0].mxu0
        %v1669 = vpop.f32.mrb[0].mxu0
        %v1670 = vadd.f32 0.0, %v1669
        %v1671 = vpop.f32.mrb[0].mxu0
        %1672 = vdwg.mxu0
        %s1673 = scalar_lea.vmem [#allocation5], 16
        %v1674 = vld [vmem:[%s1673] sm:$0x3]
        %v1676 = vlaneseq
        %v1677 = vshrl.u32 %v1676, 7
        %v1678 = vsub.s32 0, %v1677
        %v1679 = vrot.slane %v1674, %v1678
        %v1680 = vlaneseq
        %v1681 = vshrl.u32 %v1680, 7
        %v1682 = vsub.s32 1, %v1681
        %v1683 = vrot.slane %v1674, %v1682
        %1684 = vrot.lane.b32.xlu0 %v1679, 34
        %v1685 = vpop.permute.xlu0 %1684
        %1686 = vrot.lane.b32.xlu0 %v1683, 34
        %v1687 = vpop.permute.xlu0 %1686
        %vm1688 = vcmask 277504
        %v1689 = vsel %vm1688, %v1685, %v1687
        %v1693 = vmul.f32 %v1624, %v1685
        %v1694 = vmul.f32 %v1626, %v1689
        %v1695 = vmul.f32 %v1667, %v1687
        %v1696 = vmul.f32 %v1628, %v1685
        %v1697 = vmul.f32 %v1630, %v1689
        %v1698 = vmul.f32 %v1670, %v1687
        %1705 = vrot.lane.b32.xlu0 %v1693, 94
        %v1706 = vpop.permute.xlu0 %1705
        %1707 = vrot.lane.b32.xlu0 %v1694, 94
        %v1708 = vpop.permute.xlu0 %1707
        %1709 = vrot.lane.b32.xlu0 %v1695, 94
        %v1710 = vpop.permute.xlu0 %1709
        %1711 = vrot.lane.b32.xlu0 %v1696, 94
        %v1712 = vpop.permute.xlu0 %1711
        %1713 = vrot.lane.b32.xlu0 %v1697, 94
        %v1714 = vpop.permute.xlu0 %1713
        %1715 = vrot.lane.b32.xlu0 %v1698, 94
        %v1716 = vpop.permute.xlu0 %1715
        %vm1717 = vcmask 769024
        %v1718 = vsel %vm1717, %v1706, %v1708
        %v1719 = vsel %vm1717, %v1708, %v1710
        %v1720 = vsel %vm1717, %v1712, %v1714
        %v1721 = vsel %vm1717, %v1714, %v1716
        %v1726 = vadd.f32 %v1574, %v1718
        %v1727 = vadd.f32 %v1575, %v1719
        %v1728 = vadd.f32 %v1576, %v1720
        %v1729 = vadd.f32 %v1577, %v1721
        %v1730 = vld [vmem:[%s3] sm:$0xff]
        %v1731 = vld [vmem:[%s3 + $0x8] sm:$0xff]
        %1733 = vset.pattern.permute.xlu0 0
        %1734 = vperm.xlu0 %1733, %v1730
        %v1735 = vpop.permute.xlu0 %1734
        %1738 = vset.pattern.permute.xlu0 0
        %1739 = vperm.xlu0 %1738, %v1731
        %v1740 = vpop.permute.xlu0 %1739
        %v1742 = vadd.f32 %v1726, %v1735
        %v1743 = vadd.f32 %v1727, %v1735
        %v1744 = vadd.f32 %v1728, %v1740
        %v1745 = vadd.f32 %v1729, %v1740
        %v1746 = vmax.f32 %v1742, 0.0
        %v1747 = vmax.f32 %v1743, 0.0
        %v1748 = vmax.f32 %v1744, 0.0
        %v1749 = vmax.f32 %v1745, 0.0
        %v1750 = vld [vmem:[%s4] sm:$0xf]
        %v1751 = vld [vmem:[%s4 + $0x4] sm:$0xf]
        %v1754 = vunpack.c.l.b16 %v1750
        %v1755 = vunpack.c.l.b16 %v1751
        %v1756 = vpack.c.b16 %v1755, %v1754
        %v1758 = vsel %vm442, %v1756, 0
        %1760 = vmatprep.subr.bf16.mxu0 %v439
        %1761 = vmatpush1.bf16.msra.mxu0 %v438
        %1762 = vmatprep.subr.bf16.mxu0 0
        %1763 = vmatpush1.bf16.msra.mxu0 0
        %1764 = vmatprep.subr.bf16.mxu0 0
        %1765 = vmatpush1.bf16.msra.mxu0 0
        %1766 = vmatprep.subr.bf16.mxu0 0
        %1767 = vmatpush1.bf16.msra.mxu0 0
        %1768 = vmatprep.subr.bf16.mxu0 0
        %1769 = vmatpush1.bf16.msra.mxu0 0
        %1770 = vmatprep.subr.bf16.mxu0 0
        %1771 = vmatpush1.bf16.msra.mxu0 0
        %1772 = vmatprep.subr.bf16.mxu0 0
        %1773 = vmatpush1.bf16.msra.mxu0 0
        %1774 = vmatprep.subr.bf16.mxu0 0
        %1775 = vmatpush1.bf16.msra.mxu0 0
        %1776 = vmatprep.subr.bf16.mxu0 0
        %1777 = vmatpush1.bf16.msra.mxu0 0
        %1778 = vmatprep.subr.bf16.mxu0 0
        %1779 = vmatpush1.bf16.msra.mxu0 0
        %1780 = vmatprep.subr.bf16.mxu0 0
        %1781 = vmatpush1.bf16.msra.mxu0 0
        %1782 = vmatprep.subr.bf16.mxu0 0
        %1783 = vmatpush1.bf16.msra.mxu0 0
        %1784 = vmatprep.subr.bf16.mxu0 0
        %1785 = vmatpush1.bf16.msra.mxu0 0
        %1786 = vmatprep.subr.bf16.mxu0 0
        %1787 = vmatpush1.bf16.msra.mxu0 0
        %1788 = vmatprep.subr.bf16.mxu0 0
        %1789 = vmatpush1.bf16.msra.mxu0 0
        %1790 = vmatprep.subr.bf16.mxu0 0
        %1791 = vmatpush1.bf16.msra.mxu0 0
        %1792 = vmatprep.mubr.bf16.mxu0 0
        %1793 = vmatmul.mubr.bf16.gmra.mrb[0].mxu0 %v1758
        %v1794 = vpop.f32.mrb[0].mxu0
        %v1795 = vadd.f32 0.0, %v1794
        %v1796 = vpop.f32.mrb[0].mxu0
        %v1797 = vadd.f32 0.0, %v1796
        %v1798 = vpop.f32.mrb[0].mxu0
        %v1799 = vadd.f32 0.0, %v1798
        %v1800 = vpop.f32.mrb[0].mxu0
        %v1801 = vadd.f32 0.0, %v1800
        %1802 = vdwg.mxu0
        %1803 = vmatprep.subr.bf16.mxu0 0
        %1804 = vmatpush1.bf16.msra.mxu0 %v521
        %1805 = vmatprep.subr.bf16.mxu0 0
        %1806 = vmatpush1.bf16.msra.mxu0 0
        %1807 = vmatprep.subr.bf16.mxu0 0
        %1808 = vmatpush1.bf16.msra.mxu0 0
        %1809 = vmatprep.subr.bf16.mxu0 0
        %1810 = vmatpush1.bf16.msra.mxu0 0
        %1811 = vmatprep.subr.bf16.mxu0 0
        %1812 = vmatpush1.bf16.msra.mxu0 0
        %1813 = vmatprep.subr.bf16.mxu0 0
        %1814 = vmatpush1.bf16.msra.mxu0 0
        %1815 = vmatprep.subr.bf16.mxu0 0
        %1816 = vmatpush1.bf16.msra.mxu0 0
        %1817 = vmatprep.subr.bf16.mxu0 0
        %1818 = vmatpush1.bf16.msra.mxu0 0
        %1819 = vmatprep.subr.bf16.mxu0 0
        %1820 = vmatpush1.bf16.msra.mxu0 0
        %1821 = vmatprep.subr.bf16.mxu0 0
        %1822 = vmatpush1.bf16.msra.mxu0 0
        %1823 = vmatprep.subr.bf16.mxu0 0
        %1824 = vmatpush1.bf16.msra.mxu0 0
        %1825 = vmatprep.subr.bf16.mxu0 0
        %1826 = vmatpush1.bf16.msra.mxu0 0
        %1827 = vmatprep.subr.bf16.mxu0 0
        %1828 = vmatpush1.bf16.msra.mxu0 0
        %1829 = vmatprep.subr.bf16.mxu0 0
        %1830 = vmatpush1.bf16.msra.mxu0 0
        %1831 = vmatprep.subr.bf16.mxu0 0
        %1832 = vmatpush1.bf16.msra.mxu0 0
        %1833 = vmatprep.subr.bf16.mxu0 0
        %1834 = vmatpush1.bf16.msra.mxu0 0
        %1835 = vmatprep.mubr.bf16.mxu0 0
        %1836 = vmatmul.mubr.bf16.gmra.mrb[0].mxu0 %v1758
        %v1837 = vpop.f32.mrb[0].mxu0
        %v1838 = vadd.f32 0.0, %v1837
        %v1839 = vpop.f32.mrb[0].mxu0
        %v1840 = vpop.f32.mrb[0].mxu0
        %v1841 = vadd.f32 0.0, %v1840
        %v1842 = vpop.f32.mrb[0].mxu0
        %1843 = vdwg.mxu0
        %v1844 = vld [vmem:[%s5] sm:$0xff]
        %v1845 = vld [vmem:[%s5 + $0x8] sm:$0xff]
        %1847 = vset.pattern.permute.xlu0 0
        %1848 = vperm.xlu0 %1847, %v1844
        %v1849 = vpop.permute.xlu0 %1848
        %1852 = vset.pattern.permute.xlu0 0
        %1853 = vperm.xlu0 %1852, %v1845
        %v1854 = vpop.permute.xlu0 %1853
        %v1856 = vadd.f32 %v1795, %v1849
        %v1857 = vadd.f32 %v1797, %v1849
        %v1858 = vadd.f32 %v1838, %v1849
        %v1859 = vadd.f32 %v1799, %v1854
        %v1860 = vadd.f32 %v1801, %v1854
        %v1861 = vadd.f32 %v1841, %v1854
        %v1862 = vld [vmem:[%s6] sm:$0xf]
        %v1863 = vpack.c.bf16 %v1748, %v1746
        %v1864 = vpack.c.bf16 %v1749, %v1747
        %v1865 = vld [vmem:[%s7] sm:$0xf]
        %v1867 = vsel %vm442, %v1865, 0
        %1869 = vmatprep.subr.bf16.mxu0 %v439
        %1870 = vmatpush1.bf16.msra.mxu0 %v438
        %1871 = vmatprep.subr.bf16.mxu0 0
        %1872 = vmatpush1.bf16.msra.mxu0 0
        %1873 = vmatprep.subr.bf16.mxu0 0
        %1874 = vmatpush1.bf16.msra.mxu0 0
        %1875 = vmatprep.subr.bf16.mxu0 0
        %1876 = vmatpush1.bf16.msra.mxu0 0
        %1877 = vmatprep.subr.bf16.mxu0 0
        %1878 = vmatpush1.bf16.msra.mxu0 0
        %1879 = vmatprep.subr.bf16.mxu0 0
        %1880 = vmatpush1.bf16.msra.mxu0 0
        %1881 = vmatprep.subr.bf16.mxu0 0
        %1882 = vmatpush1.bf16.msra.mxu0 0
        %1883 = vmatprep.subr.bf16.mxu0 0
        %1884 = vmatpush1.bf16.msra.mxu0 0
        %1885 = vmatprep.subr.bf16.mxu0 0
        %1886 = vmatpush1.bf16.msra.mxu0 0
        %1887 = vmatprep.subr.bf16.mxu0 0
        %1888 = vmatpush1.bf16.msra.mxu0 0
        %1889 = vmatprep.subr.bf16.mxu0 0
        %1890 = vmatpush1.bf16.msra.mxu0 0
        %1891 = vmatprep.subr.bf16.mxu0 0
        %1892 = vmatpush1.bf16.msra.mxu0 0
        %1893 = vmatprep.subr.bf16.mxu0 0
        %1894 = vmatpush1.bf16.msra.mxu0 0
        %1895 = vmatprep.subr.bf16.mxu0 0
        %1896 = vmatpush1.bf16.msra.mxu0 0
        %1897 = vmatprep.subr.bf16.mxu0 0
        %1898 = vmatpush1.bf16.msra.mxu0 0
        %1899 = vmatprep.subr.bf16.mxu0 0
        %1900 = vmatpush1.bf16.msra.mxu0 0
        %1901 = vmatprep.mubr.bf16.mxu0 0
        %1902 = vmatmul.mubr.bf16.gmra.mrb[0].mxu0 %v1867
        %v1903 = vpop.f32.mrb[0].mxu0
        %v1904 = vadd.f32 0.0, %v1903
        %v1905 = vpop.f32.mrb[0].mxu0
        %v1906 = vadd.f32 0.0, %v1905
        %v1907 = vpop.f32.mrb[0].mxu0
        %v1908 = vpop.f32.mrb[0].mxu0
        %1909 = vdwg.mxu0
        %1910 = vmatprep.subr.bf16.mxu0 0
        %1911 = vmatpush1.bf16.msra.mxu0 %v521
        %1912 = vmatprep.subr.bf16.mxu0 0
        %1913 = vmatpush1.bf16.msra.mxu0 0
        %1914 = vmatprep.subr.bf16.mxu0 0
        %1915 = vmatpush1.bf16.msra.mxu0 0
        %1916 = vmatprep.subr.bf16.mxu0 0
        %1917 = vmatpush1.bf16.msra.mxu0 0
        %1918 = vmatprep.subr.bf16.mxu0 0
        %1919 = vmatpush1.bf16.msra.mxu0 0
        %1920 = vmatprep.subr.bf16.mxu0 0
        %1921 = vmatpush1.bf16.msra.mxu0 0
        %1922 = vmatprep.subr.bf16.mxu0 0
        %1923 = vmatpush1.bf16.msra.mxu0 0
        %1924 = vmatprep.subr.bf16.mxu0 0
        %1925 = vmatpush1.bf16.msra.mxu0 0
        %1926 = vmatprep.subr.bf16.mxu0 0
        %1927 = vmatpush1.bf16.msra.mxu0 0
        %1928 = vmatprep.subr.bf16.mxu0 0
        %1929 = vmatpush1.bf16.msra.mxu0 0
        %1930 = vmatprep.subr.bf16.mxu0 0
        %1931 = vmatpush1.bf16.msra.mxu0 0
        %1932 = vmatprep.subr.bf16.mxu0 0
        %1933 = vmatpush1.bf16.msra.mxu0 0
        %1934 = vmatprep.subr.bf16.mxu0 0
        %1935 = vmatpush1.bf16.msra.mxu0 0
        %1936 = vmatprep.subr.bf16.mxu0 0
        %1937 = vmatpush1.bf16.msra.mxu0 0
        %1938 = vmatprep.subr.bf16.mxu0 0
        %1939 = vmatpush1.bf16.msra.mxu0 0
        %1940 = vmatprep.subr.bf16.mxu0 0
        %1941 = vmatpush1.bf16.msra.mxu0 0
        %1942 = vmatprep.mubr.bf16.mxu0 0
        %1943 = vmatmul.mubr.bf16.gmra.mrb[0].mxu0 %v1867
        %v1944 = vpop.f32.mrb[0].mxu0
        %v1945 = vadd.f32 0.0, %v1944
        %v1946 = vpop.f32.mrb[0].mxu0
        %v1947 = vpop.f32.mrb[0].mxu0
        %v1948 = vpop.f32.mrb[0].mxu0
        %1949 = vdwg.mxu0
        %1953 = vrot.lane.b32.xlu0 %v1904, 111
        %v1954 = vpop.permute.xlu0 %1953
        %1955 = vrot.lane.b32.xlu0 %v1906, 111
        %v1956 = vpop.permute.xlu0 %1955
        %1957 = vrot.lane.b32.xlu0 %v1945, 111
        %v1958 = vpop.permute.xlu0 %1957
        %v1959 = vsel %vm1109, %v1954, %v1956
        %v1960 = vsel %vm1109, %v1956, %v1958
        %v1964 = vsel %vm442, %v1862, 0
        %1966 = vmatprep.subr.bf16.mxu0 %v1864
        %1967 = vmatpush1.bf16.msra.mxu0 %v1863
        %1968 = vmatprep.subr.bf16.mxu0 0
        %1969 = vmatpush1.bf16.msra.mxu0 0
        %1970 = vmatprep.subr.bf16.mxu0 0
        %1971 = vmatpush1.bf16.msra.mxu0 0
        %1972 = vmatprep.subr.bf16.mxu0 0
        %1973 = vmatpush1.bf16.msra.mxu0 0
        %1974 = vmatprep.subr.bf16.mxu0 0
        %1975 = vmatpush1.bf16.msra.mxu0 0
        %1976 = vmatprep.subr.bf16.mxu0 0
        %1977 = vmatpush1.bf16.msra.mxu0 0
        %1978 = vmatprep.subr.bf16.mxu0 0
        %1979 = vmatpush1.bf16.msra.mxu0 0
        %1980 = vmatprep.subr.bf16.mxu0 0
        %1981 = vmatpush1.bf16.msra.mxu0 0
        %1982 = vmatprep.subr.bf16.mxu0 0
        %1983 = vmatpush1.bf16.msra.mxu0 0
        %1984 = vmatprep.subr.bf16.mxu0 0
        %1985 = vmatpush1.bf16.msra.mxu0 0
        %1986 = vmatprep.subr.bf16.mxu0 0
        %1987 = vmatpush1.bf16.msra.mxu0 0
        %1988 = vmatprep.subr.bf16.mxu0 0
        %1989 = vmatpush1.bf16.msra.mxu0 0
        %1990 = vmatprep.subr.bf16.mxu0 0
        %1991 = vmatpush1.bf16.msra.mxu0 0
        %1992 = vmatprep.subr.bf16.mxu0 0
        %1993 = vmatpush1.bf16.msra.mxu0 0
        %1994 = vmatprep.subr.bf16.mxu0 0
        %1995 = vmatpush1.bf16.msra.mxu0 0
        %1996 = vmatprep.subr.bf16.mxu0 0
        %1997 = vmatpush1.bf16.msra.mxu0 0
        %1998 = vmatprep.mubr.bf16.mxu0 0
        %1999 = vmatmul.mubr.bf16.gmra.mrb[0].mxu0 %v1964
        %v2000 = vpop.f32.mrb[0].mxu0
        %v2001 = vadd.f32 %v1959, %v2000
        %v2002 = vpop.f32.mrb[0].mxu0
        %v2003 = vadd.f32 %v1960, %v2002
        %v2004 = vpop.f32.mrb[0].mxu0
        %v2005 = vpop.f32.mrb[0].mxu0
        %2006 = vdwg.mxu0
        %v2007 = vld [vmem:[%s8] sm:$0xff]
        %2009 = vset.pattern.permute.xlu0 0
        %2010 = vperm.xlu0 %2009, %v2007
        %v2011 = vpop.permute.xlu0 %2010
        %v2013 = vadd.f32 %v2001, %v2011
        %v2014 = vadd.f32 %v2003, %v2011
        %v2015 = vmax.f32 %v2013, 0.0
        %v2016 = vmax.f32 %v2014, 0.0
        %v2017 = vld [vmem:[%s9] sm:$0xf]
        %v2018 = vld [vmem:[%s9 + $0x4] sm:$0xf]
        %v2019 = vpack.c.bf16 %v2015, %v2015
        %v2020 = vpack.c.bf16 %v2016, %v2016
        %v2021 = vld [vmem:[%s10] sm:$0xff]
        %v2022 = vld [vmem:[%s10 + $0x8] sm:$0xff]
        %2024 = vset.pattern.permute.xlu0 0
        %2025 = vperm.xlu0 %2024, %v2021
        %v2026 = vpop.permute.xlu0 %2025
        %2029 = vset.pattern.permute.xlu0 0
        %2030 = vperm.xlu0 %2029, %v2022
        %v2031 = vpop.permute.xlu0 %2030
        %v2035 = vunpack.c.l.b16 %v2017
        %v2036 = vunpack.c.l.b16 %v2018
        %v2037 = vpack.c.b16 %v2036, %v2035
        %vm2038 = vcmask 64512
        %v2040 = vsel %vm2038, %v2037, 0
        %vm2042 = vcmask 1043456
        %v2044 = vsel %vm2042, %v2019, 0
        %v2047 = vsel %vm2042, %v2020, 0
        %2049 = vmatprep.subr.bf16.mxu0 %v2047
        %2050 = vmatpush1.bf16.msra.mxu0 %v2044
        %2051 = vmatprep.subr.bf16.mxu0 0
        %2052 = vmatpush1.bf16.msra.mxu0 0
        %2053 = vmatprep.subr.bf16.mxu0 0
        %2054 = vmatpush1.bf16.msra.mxu0 0
        %2055 = vmatprep.subr.bf16.mxu0 0
        %2056 = vmatpush1.bf16.msra.mxu0 0
        %2057 = vmatprep.subr.bf16.mxu0 0
        %2058 = vmatpush1.bf16.msra.mxu0 0
        %2059 = vmatprep.subr.bf16.mxu0 0
        %2060 = vmatpush1.bf16.msra.mxu0 0
        %2061 = vmatprep.subr.bf16.mxu0 0
        %2062 = vmatpush1.bf16.msra.mxu0 0
        %2063 = vmatprep.subr.bf16.mxu0 0
        %2064 = vmatpush1.bf16.msra.mxu0 0
        %2065 = vmatprep.subr.bf16.mxu0 0
        %2066 = vmatpush1.bf16.msra.mxu0 0
        %2067 = vmatprep.subr.bf16.mxu0 0
        %2068 = vmatpush1.bf16.msra.mxu0 0
        %2069 = vmatprep.subr.bf16.mxu0 0
        %2070 = vmatpush1.bf16.msra.mxu0 0
        %2071 = vmatprep.subr.bf16.mxu0 0
        %2072 = vmatpush1.bf16.msra.mxu0 0
        %2073 = vmatprep.subr.bf16.mxu0 0
        %2074 = vmatpush1.bf16.msra.mxu0 0
        %2075 = vmatprep.subr.bf16.mxu0 0
        %2076 = vmatpush1.bf16.msra.mxu0 0
        %2077 = vmatprep.subr.bf16.mxu0 0
        %2078 = vmatpush1.bf16.msra.mxu0 0
        %2079 = vmatprep.subr.bf16.mxu0 0
        %2080 = vmatpush1.bf16.msra.mxu0 0
        %2081 = vmatprep.mubr.bf16.mxu0 0
        %2082 = vmatmul.mubr.bf16.gmra.mrb[0].mxu0 %v2040
        %v2083 = vpop.f32.mrb[0].mxu0
        %v2084 = vadd.f32 %v2026, %v2083
        %v2085 = vpop.f32.mrb[0].mxu0
        %v2086 = vadd.f32 %v2026, %v2085
        %v2087 = vpop.f32.mrb[0].mxu0
        %v2088 = vadd.f32 %v2031, %v2087
        %v2089 = vpop.f32.mrb[0].mxu0
        %v2090 = vadd.f32 %v2031, %v2089
        %2091 = vdwg.mxu0
        %v2092 = vmax.f32 %v2084, %v2086
        %2093 = vmax.xlane.f32.xlu0 %v2092
        %v2094 = vpop.xlane.xlu0 %2093
        %v2095 = vmax.f32 %v2088, %v2090
        %2096 = vmax.xlane.f32.xlu0 %v2095
        %v2097 = vpop.xlane.xlu0 %2096
        %v2098 = vsub.f32 %v2084, %v2094
        %v2099 = vsub.f32 %v2086, %v2094
        %v2100 = vsub.f32 %v2088, %v2097
        %v2101 = vsub.f32 %v2090, %v2097
        %v2102 = vmul.f32 %v2098, 1.442695
        %v2103 = vpow.pop %v2102
        %v2104 = vmul.f32 %v2099, 1.442695
        %v2105 = vpow.pop %v2104
        %v2106 = vmul.f32 %v2100, 1.442695
        %v2107 = vpow.pop %v2106
        %v2108 = vmul.f32 %v2101, 1.442695
        %v2109 = vpow.pop %v2108
        %v2110 = vadd.f32 %v2103, %v2105
        %2111 = vadd.xlane.f32.xlu0 %v2110
        %v2112 = vpop.xlane.xlu0 %2111
        %v2113 = vadd.f32 %v2107, %v2109
        %2114 = vadd.xlane.f32.xlu0 %v2113
        %v2115 = vpop.xlane.xlu0 %2114
        %v2116 = vrcp.pop %v2112
        %v2117 = vrcp.pop %v2115
        %v2118 = vmul.f32 %v2103, %v2116
        %v2119 = vmul.f32 %v2105, %v2116
        %v2120 = vmul.f32 %v2107, %v2117
        %v2121 = vmul.f32 %v2109, %v2117
        %2128 = vrot.lane.b32.xlu0 %v1856, 111
        %v2129 = vpop.permute.xlu0 %2128
        %2130 = vrot.lane.b32.xlu0 %v1857, 111
        %v2131 = vpop.permute.xlu0 %2130
        %2132 = vrot.lane.b32.xlu0 %v1858, 111
        %v2133 = vpop.permute.xlu0 %2132
        %2134 = vrot.lane.b32.xlu0 %v1859, 111
        %v2135 = vpop.permute.xlu0 %2134
        %2136 = vrot.lane.b32.xlu0 %v1860, 111
        %v2137 = vpop.permute.xlu0 %2136
        %2138 = vrot.lane.b32.xlu0 %v1861, 111
        %v2139 = vpop.permute.xlu0 %2138
        %v2140 = vsel %vm1109, %v2129, %v2131
        %v2141 = vsel %vm1109, %v2131, %v2133
        %v2142 = vsel %vm1109, %v2135, %v2137
        %v2143 = vsel %vm1109, %v2137, %v2139
        %v2148 = vmul.f32 %v2118, %v2140
        %v2149 = vmul.f32 %v2119, %v2141
        %v2150 = vmul.f32 %v2120, %v2142
        %v2151 = vmul.f32 %v2121, %v2143
        %v2152 = vadd.f32 %v1746, %v2148
        %v2153 = vadd.f32 %v1747, %v2149
        %v2154 = vadd.f32 %v1748, %v2150
        %v2155 = vadd.f32 %v1749, %v2151
        %2156 = vst [vmem:[%s419] sm:$0xff] %v2152
        %2157 = vst [vmem:[%s419 + $0x8] sm:$0xff] %v2153
        %2158 = vst [vmem:[%s419 + $0x10] sm:$0xff] %v2154
        %2159 = vst [vmem:[%s419 + $0x18] sm:$0xff] %v2155
        %s2160 = sand.u32 %s273, 1
        %s2161 = scalar_lea.sflag [#allocation4], %s2160
        %s2162 = sand.u32 %s273, 1
        %s2163 = smul.addr %s2162, 32
        %s2164 = scalar_lea.vmem [#allocation7], %s2163
        // Predicated region
        $region73: #{tpu_custom_call.1} parent=63 // pred_check
          %p2165 = pneg %p283
        $region74: #{tpu_custom_call.1} parent=63 // pred_check_branch
          %2167 = sbr.rel (%p2165) target = $region76
        $region75: #{tpu_custom_call.1} parent=63 // pred_region
          %s2169 = ssub.s32 512, 512
          %2170 = vsyncadd %s2161, %s2169
          %s2171 = smul.addr %s29, 4
          %s2172 = smul.addr %s2171, 128
          %s2173 = scalar_lea.hbm %s11, %s2172
          %s2174 = sshll.u32 %s2164, 4
          %s2175 = int_to_ptr.vmem [resolvable:$true] %s2174
          %2180 = dma.vmem_to_hbm [thread:$0]  %s2175, 512, %s2173, %s2161, 256, 256, 16
        $region76: #{tpu_custom_call.1} parent=63 // pred_fallthru
          _
      $region64: #{tpu_custom_call.1} parent=5 // pred_fallthru
        _
      %p2181 = scmp.le.s32.totalorder 2, %s24
      // Predicated region
      $region77: #{tpu_custom_call.1} parent=5 // pred_check
        %p2182 = pneg %p2181
      $region78: #{tpu_custom_call.1} parent=5 // pred_check_branch
        %2184 = sbr.rel (%p2182) target = $region80
      $region79: #{tpu_custom_call.1} parent=5 // pred_region
        %s2185 = ssub.s32 %s24, 2
        // Predicated region
        $region81: #{tpu_custom_call.1} parent=79 // pred_check
          %p2186 = pneg %p289
        $region82: #{tpu_custom_call.1} parent=79 // pred_check_branch
          %2188 = sbr.rel (%p2186) target = $region84
        $region83: #{tpu_custom_call.1} parent=79 // pred_region
          %s2189 = sand.u32 %s274, 1
          %s2190 = scalar_lea.sflag [#allocation4], %s2189
          %s2191 = sand.u32 %s274, 1
          %s2192 = smul.addr %s2191, 32
          %s2193 = scalar_lea.vmem [#allocation7], %s2192
          %2194 = dma.done %s2190, 512
        $region84: #{tpu_custom_call.1} parent=79 // pred_fallthru
          _
      $region80: #{tpu_custom_call.1} parent=5 // pred_fallthru
        _
    $region6: #{tpu_custom_call.1} parent=1 // loop_footer
      %s28 = sadd.s32 1, %s24
    $region7: #{tpu_custom_call.1} parent=1 // loop_footer_branch
      %23 = sbr.rel target = $region3
    $region8: #{tpu_custom_call.1} parent=1 // loop_exit
      _
    %2195 = vsyncpa [#allocation3], 1
    %s2196 = scalar_lea.sflag [#allocation3], 1
    %2197 = vsyncpa %s2196, 1
    %2198 = vsyncpa [#allocation6], 1
    %2199 = vsyncpa [#allocation4], 1
    %s2200 = scalar_lea.sflag [#allocation4], 1
    %2201 = vsyncpa %s2200, 1

</llo_original>
